<compile_context>
chip_gen: v7x
topology: tpu7x:2x2x1
jax: 0.10.0
libtpu: 0.0.40
codegen_flags: <defaults>
</compile_context>

<pallas_src>
import math
import numpy as np
import jax
import jax.numpy as jnp
from jax.experimental import pallas as pl
from jax.experimental.pallas import tpu as pltpu


# ----------------------------------------------------------------------------- kernel

def make_fused_lstm_kernel(n_layers, T, Bp, H):
    """Fused kernel for the whole model (all LSTM layers + FC head).

    Kernel ref order:
      x_ref                       : (T*Bp, D_in) f32  (time-major, batch padded to Bp)
      per layer l in [0, n_layers): wih_ref (D_l, 4H), whh_ref (H, 4H), b_ref (1, 4H)
                                    (g-gate columns pre-scaled by 2)
      fcw_ref                     : (H, NCp)  (zero-padded to lane-dense width)
      fcb_ref                     : (1, NCp)
      out_ref                     : (Bp, NCp)        [output]
    """

    def kernel(*refs):
        x_ref = refs[0]
        layer_refs = []
        idx = 1
        for _ in range(n_layers):
            layer_refs.append((refs[idx], refs[idx + 1], refs[idx + 2]))
            idx += 3
        fcw_ref = refs[idx]
        fcb_ref = refs[idx + 1]
        out_ref = refs[idx + 2]

        wih = [r[...] for (r, _, _) in layer_refs]    # (D_l, 4H)
        whh = [r[...] for (_, r, _) in layer_refs]    # (H, 4H)
        bias = [r[...] for (_, _, r) in layer_refs]   # (1, 4H)

        # Layer-0 input projection hoisted out of the recurrence: one big MXU
        # matmul over all T*Bp rows, bias added once.
        xproj0 = (
            jnp.dot(x_ref[...], wih[0], preferred_element_type=jnp.float32) + bias[0]
        )  # (T*Bp, 4H)

        h = [jnp.zeros((Bp, H), jnp.float32) for _ in range(n_layers)]
        c = [jnp.zeros((Bp, H), jnp.float32) for _ in range(n_layers)]

        def lstm_cell(gates, c_prev):
            # One full-width sigmoid over all 4H lanes; the g gate is recovered
            # via tanh(z) = 2*sigmoid(2z) - 1 (its columns were pre-scaled by 2),
            # so only 2 EUP passes per step: sigmoid(gates) + tanh(c).
            sig = jax.nn.sigmoid(gates)
            i_g = sig[:, 0 * H:1 * H]
            f_g = sig[:, 1 * H:2 * H]
            g_g = 2.0 * sig[:, 2 * H:3 * H] - 1.0
            o_g = sig[:, 3 * H:4 * H]
            c_new = f_g * c_prev + i_g * g_g
            h_new = o_g * jnp.tanh(c_new)
            return h_new, c_new

        # Wavefront over layers: all per-step state stays in SSA values / vregs
        # (no VMEM scratch, no inter-layer full-sequence barrier), so the LLO
        # scheduler can overlap layer l step t with layer l-1 step t+1.
        for t in range(T):
            gates0 = xproj0[t * Bp:(t + 1) * Bp, :] + jnp.dot(
                h[0], whh[0], preferred_element_type=jnp.float32
            )
            h[0], c[0] = lstm_cell(gates0, c[0])
            for l in range(1, n_layers):
                gates = (
                    jnp.dot(h[l - 1], wih[l], preferred_element_type=jnp.float32)
                    + jnp.dot(h[l], whh[l], preferred_element_type=jnp.float32)
                    + bias[l]
                )
                h[l], c[l] = lstm_cell(gates, c[l])
            # TODO(synk): hold W_hh in the MXU weight staging registers across the
            # unrolled time loop (pltpu.matmul_push_rhs / matmul_acc_lhs /
            # matmul_pop) to avoid re-pushing the same RHS every step.

        # FC head on the final timestep's hidden state (lane-dense, zero-padded).
        out_ref[...] = (
            jnp.dot(h[-1], fcw_ref[...], preferred_element_type=jnp.float32)
            + fcb_ref[...]
        )

    return kernel


# ----------------------------------------------------------------------------- wrapper

def prepare_params(params):
    """One-time parameter prep: transpose weights, fold biases, pre-scale the
    g-gate columns by 2 (tanh-via-sigmoid identity), pad FC head to 128 lanes."""
    prep = {"wih": [], "whh": [], "b": []}
    for (w_ih, w_hh, b_ih, b_hh) in params["lstm"]:
        H = w_hh.shape[1]
        wih = jnp.asarray(w_ih.T, jnp.float32)                    # (D_in, 4H)
        whh = jnp.asarray(w_hh.T, jnp.float32)                    # (H, 4H)
        b = jnp.asarray((b_ih + b_hh)[None, :], jnp.float32)      # (1, 4H)
        # Scale the g-gate columns so the kernel can compute tanh(z) = 2*sigmoid(2z)-1.
        scale = jnp.ones((1, 4 * H), jnp.float32).at[:, 2 * H:3 * H].set(2.0)
        prep["wih"].append(wih * scale)
        prep["whh"].append(whh * scale)
        prep["b"].append(b * scale)

    fc_w = jnp.asarray(params["fc_w"].T, jnp.float32)             # (H, 26)
    fc_b = jnp.asarray(params["fc_b"][None, :], jnp.float32)      # (1, 26)
    H, nc = fc_w.shape
    ncp = ((nc + 127) // 128) * 128                               # lane-dense width
    prep["fc_w"] = jnp.zeros((H, ncp), jnp.float32).at[:, :nc].set(fc_w)
    prep["fc_b"] = jnp.zeros((1, ncp), jnp.float32).at[:, :nc].set(fc_b)
    return prep


def lstm_model_forward(x, prep, n_classes=26):
    """x: (B, T, 3) float32, batch-first (matches PyTorch). Returns (B, n_classes)."""
    B, T, D_in = x.shape
    n_layers = len(prep["wih"])
    H = prep["whh"][0].shape[0]
    ncp = prep["fc_w"].shape[1]

    # Pad the batch to a full sublane tile so per-step slices are (8,*)-aligned.
    # Padded rows carry independent (garbage) state and are sliced off below.
    Bp = max(8, ((B + 7) // 8) * 8)
    xp = jnp.zeros((Bp, T, D_in), jnp.float32).at[:B].set(x.astype(jnp.float32))
    # Time-major, flattened: timestep t lives in rows [t*Bp, (t+1)*Bp).
    seq = jnp.transpose(xp, (1, 0, 2)).reshape(T * Bp, D_in)

    args = [seq]
    for l in range(n_layers):
        args += [prep["wih"][l], prep["whh"][l], prep["b"][l]]
    args += [prep["fc_w"], prep["fc_b"]]

    kernel = make_fused_lstm_kernel(n_layers, T, Bp, H)

    vmem_spec = pl.BlockSpec(memory_space=pltpu.MemorySpace.VMEM)
    out = pl.pallas_call(
        kernel,
        out_shape=jax.ShapeDtypeStruct((Bp, ncp), jnp.float32),
        in_specs=[vmem_spec] * len(args),
        out_specs=vmem_spec,
        # TODO(synk): for realistic serving batches / large H add a batch-tile grid
        # axis with dimension_semantics=("parallel",) (uses both v7x TensorCores)
        # and set pltpu.CompilerParams(vmem_limit_bytes=...) / tile the 4H dim
        # before W_hh (16*H^2 B per layer) approaches v7x's 32 MiB scoped default.
    )(*args)
    return out[:B, :n_classes]


# ----------------------------------------------------------------------------- params

def init_params(key, hidden_dim, n_layers, input_size=3, num_classes=26):
    """Deterministic init mirroring the PyTorch module's parameter shapes."""
    params = {"lstm": []}
    k = 1.0 / math.sqrt(hidden_dim)
    for layer in range(n_layers):
        d_in = input_size if layer == 0 else hidden_dim
        key, k1, k2, k3, k4 = jax.random.split(key, 5)
        w_ih = jax.random.uniform(k1, (4 * hidden_dim, d_in), jnp.float32, -k, k)
        w_hh = jax.random.uniform(k2, (4 * hidden_dim, hidden_dim), jnp.float32, -k, k)
        b_ih = jax.random.uniform(k3, (4 * hidden_dim,), jnp.float32, -k, k)
        b_hh = jax.random.uniform(k4, (4 * hidden_dim,), jnp.float32, -k, k)
        params["lstm"].append((w_ih, w_hh, b_ih, b_hh))
    key, k5, k6 = jax.random.split(key, 3)
    kf = 1.0 / math.sqrt(hidden_dim)
    params["fc_w"] = jax.random.uniform(k5, (num_classes, hidden_dim), jnp.float32, -kf, kf)
    params["fc_b"] = jax.random.uniform(k6, (num_classes,), jnp.float32, -kf, kf)
    return params


# ----------------------------------------------------------------------------- reference

def reference_forward(x, params):
    """Pure-JAX reference matching PyTorch nn.LSTM (batch_first) + Linear semantics."""
    seq = x.astype(jnp.float32)  # (B, T, D)
    B, T, _ = seq.shape
    for (w_ih, w_hh, b_ih, b_hh) in params["lstm"]:
        H = w_hh.shape[1]
        h = jnp.zeros((B, H), jnp.float32)
        c = jnp.zeros((B, H), jnp.float32)
        outs = []
        for t in range(T):
            gates = seq[:, t, :] @ w_ih.T + h @ w_hh.T + b_ih + b_hh
            i_g = jax.nn.sigmoid(gates[:, 0 * H:1 * H])
            f_g = jax.nn.sigmoid(gates[:, 1 * H:2 * H])
            g_g = jnp.tanh(gates[:, 2 * H:3 * H])
            o_g = jax.nn.sigmoid(gates[:, 3 * H:4 * H])
            c = f_g * c + i_g * g_g
            h = o_g * jnp.tanh(c)
            outs.append(h)
        seq = jnp.stack(outs, axis=1)  # (B, T, H)
    return seq[:, -1, :] @ params["fc_w"].T + params["fc_b"]


# ----------------------------------------------------------------------------- main

if __name__ == "__main__":
    hidden_dim = 32
    n_layers = 2
    B, T, D_in = 2, 8, 3

    key = jax.random.PRNGKey(0)
    key, xk = jax.random.split(key)
    x = jax.random.normal(xk, (B, T, D_in), jnp.float32)

    params = init_params(jax.random.PRNGKey(0), hidden_dim, n_layers, input_size=D_in)
    prep = prepare_params(params)  # one-time transpose / bias fold / g-gate scale / FC pad

    fwd = jax.jit(lstm_model_forward, static_argnames=("n_classes",))
    logits = jax.block_until_ready(fwd(x, prep, n_classes=26))

    ref = reference_forward(x, params)
    np.testing.assert_allclose(np.asarray(logits), np.asarray(ref), rtol=1e-4, atol=1e-4)
    assert logits.shape == (B, 26)

    print("KERNEL_OK")
</pallas_src>

<mosaic_0001>
module attributes {stable_mosaic.version = 11 : i64} {
  func.func @kernel(%arg0: memref<64x3xf32, #tpu.memory_space<vmem>>, %arg1: memref<3x128xf32, #tpu.memory_space<vmem>>, %arg2: memref<32x128xf32, #tpu.memory_space<vmem>>, %arg3: memref<1x128xf32, #tpu.memory_space<vmem>>, %arg4: memref<32x128xf32, #tpu.memory_space<vmem>>, %arg5: memref<32x128xf32, #tpu.memory_space<vmem>>, %arg6: memref<1x128xf32, #tpu.memory_space<vmem>>, %arg7: memref<32x128xf32, #tpu.memory_space<vmem>>, %arg8: memref<1x128xf32, #tpu.memory_space<vmem>>, %arg9: memref<8x128xf32, #tpu.memory_space<vmem>>) attributes {dimension_semantics = [], scalar_prefetch = 0 : i64, scratch_operands = 0 : i64, tpu.core_type = #tpu.core_type<tc>} {
    %c0 = arith.constant 0 : index
    %c0_0 = arith.constant 0 : index
    %0 = vector.load %arg1[%c0, %c0_0] : memref<3x128xf32, #tpu.memory_space<vmem>>, vector<3x128xf32>
    %c0_1 = arith.constant 0 : index
    %c0_2 = arith.constant 0 : index
    %1 = vector.load %arg4[%c0_1, %c0_2] : memref<32x128xf32, #tpu.memory_space<vmem>>, vector<32x128xf32>
    %c0_3 = arith.constant 0 : index
    %c0_4 = arith.constant 0 : index
    %2 = vector.load %arg2[%c0_3, %c0_4] : memref<32x128xf32, #tpu.memory_space<vmem>>, vector<32x128xf32>
    %c0_5 = arith.constant 0 : index
    %c0_6 = arith.constant 0 : index
    %3 = vector.load %arg5[%c0_5, %c0_6] : memref<32x128xf32, #tpu.memory_space<vmem>>, vector<32x128xf32>
    %c0_7 = arith.constant 0 : index
    %c0_8 = arith.constant 0 : index
    %4 = vector.load %arg3[%c0_7, %c0_8] : memref<1x128xf32, #tpu.memory_space<vmem>>, vector<1x128xf32>
    %c0_9 = arith.constant 0 : index
    %c0_10 = arith.constant 0 : index
    %5 = vector.load %arg6[%c0_9, %c0_10] : memref<1x128xf32, #tpu.memory_space<vmem>>, vector<1x128xf32>
    %c0_11 = arith.constant 0 : index
    %c0_12 = arith.constant 0 : index
    %6 = vector.load %arg0[%c0_11, %c0_12] : memref<64x3xf32, #tpu.memory_space<vmem>>, vector<64x3xf32>
    %cst = arith.constant dense<0.000000e+00> : vector<64x128xf32>
    %7 = tpu.matmul %6, %0, %cst {dimension_numbers = #tpu.dot_dimension_numbers<[1], [0], [0], [1], [0, 0, 1, 1], [], []>} : vector<64x3xf32>, vector<3x128xf32>, vector<64x128xf32> -> vector<64x128xf32>
    %8 = vector.broadcast %4 : vector<1x128xf32> to vector<64x128xf32>
    %9 = arith.addf %7, %8 : vector<64x128xf32>
    %cst_13 = arith.constant 0.000000e+00 : f32
    %10 = vector.broadcast %cst_13 : f32 to vector<8x32xf32>
    %cst_14 = arith.constant 0.000000e+00 : f32
    %11 = vector.broadcast %cst_14 : f32 to vector<8x32xf32>
    %cst_15 = arith.constant 0.000000e+00 : f32
    %12 = vector.broadcast %cst_15 : f32 to vector<8x32xf32>
    %cst_16 = arith.constant 0.000000e+00 : f32
    %13 = vector.broadcast %cst_16 : f32 to vector<8x32xf32>
    %14 = vector.extract_strided_slice %9 {offsets = [0, 0], sizes = [8, 128], strides = [1, 1]} : vector<64x128xf32> to vector<8x128xf32>
    %cst_17 = arith.constant dense<0.000000e+00> : vector<8x128xf32>
    %15 = tpu.matmul %10, %2, %cst_17 {dimension_numbers = #tpu.dot_dimension_numbers<[1], [0], [0], [1], [0, 0, 1, 1], [], []>} : vector<8x32xf32>, vector<32x128xf32>, vector<8x128xf32> -> vector<8x128xf32>
    %16 = arith.addf %14, %15 : vector<8x128xf32>
    %17 = arith.negf %16 : vector<8x128xf32>
    %18 = math.exp %17 : vector<8x128xf32>
    %cst_18 = arith.constant 1.000000e+00 : f32
    %19 = vector.broadcast %cst_18 : f32 to vector<8x128xf32>
    %20 = arith.addf %19, %18 : vector<8x128xf32>
    %21 = arith.divf %19, %20 : vector<8x128xf32>
    %22 = vector.extract_strided_slice %21 {offsets = [0, 0], sizes = [8, 32], strides = [1, 1]} : vector<8x128xf32> to vector<8x32xf32>
    %23 = vector.extract_strided_slice %21 {offsets = [0, 32], sizes = [8, 32], strides = [1, 1]} : vector<8x128xf32> to vector<8x32xf32>
    %24 = vector.extract_strided_slice %21 {offsets = [0, 64], sizes = [8, 32], strides = [1, 1]} : vector<8x128xf32> to vector<8x32xf32>
    %cst_19 = arith.constant 2.000000e+00 : f32
    %25 = vector.broadcast %cst_19 : f32 to vector<8x32xf32>
    %26 = arith.mulf %25, %24 : vector<8x32xf32>
    %cst_20 = arith.constant 1.000000e+00 : f32
    %27 = vector.broadcast %cst_20 : f32 to vector<8x32xf32>
    %28 = arith.subf %26, %27 : vector<8x32xf32>
    %29 = vector.extract_strided_slice %21 {offsets = [0, 96], sizes = [8, 32], strides = [1, 1]} : vector<8x128xf32> to vector<8x32xf32>
    %30 = arith.mulf %23, %12 : vector<8x32xf32>
    %31 = arith.mulf %22, %28 : vector<8x32xf32>
    %32 = arith.addf %30, %31 : vector<8x32xf32>
    %33 = math.tanh %32 : vector<8x32xf32>
    %34 = arith.mulf %29, %33 : vector<8x32xf32>
    %cst_21 = arith.constant dense<0.000000e+00> : vector<8x128xf32>
    %35 = tpu.matmul %34, %1, %cst_21 {dimension_numbers = #tpu.dot_dimension_numbers<[1], [0], [0], [1], [0, 0, 1, 1], [], []>} : vector<8x32xf32>, vector<32x128xf32>, vector<8x128xf32> -> vector<8x128xf32>
    %cst_22 = arith.constant dense<0.000000e+00> : vector<8x128xf32>
    %36 = tpu.matmul %11, %3, %cst_22 {dimension_numbers = #tpu.dot_dimension_numbers<[1], [0], [0], [1], [0, 0, 1, 1], [], []>} : vector<8x32xf32>, vector<32x128xf32>, vector<8x128xf32> -> vector<8x128xf32>
    %37 = arith.addf %35, %36 : vector<8x128xf32>
    %38 = vector.broadcast %5 : vector<1x128xf32> to vector<8x128xf32>
    %39 = arith.addf %37, %38 : vector<8x128xf32>
    %40 = arith.negf %39 : vector<8x128xf32>
    %41 = math.exp %40 : vector<8x128xf32>
    %cst_23 = arith.constant 1.000000e+00 : f32
    %42 = vector.broadcast %cst_23 : f32 to vector<8x128xf32>
    %43 = arith.addf %42, %41 : vector<8x128xf32>
    %44 = arith.divf %42, %43 : vector<8x128xf32>
    %45 = vector.extract_strided_slice %44 {offsets = [0, 0], sizes = [8, 32], strides = [1, 1]} : vector<8x128xf32> to vector<8x32xf32>
    %46 = vector.extract_strided_slice %44 {offsets = [0, 32], sizes = [8, 32], strides = [1, 1]} : vector<8x128xf32> to vector<8x32xf32>
    %47 = vector.extract_strided_slice %44 {offsets = [0, 64], sizes = [8, 32], strides = [1, 1]} : vector<8x128xf32> to vector<8x32xf32>
    %cst_24 = arith.constant 2.000000e+00 : f32
    %48 = vector.broadcast %cst_24 : f32 to vector<8x32xf32>
    %49 = arith.mulf %48, %47 : vector<8x32xf32>
    %cst_25 = arith.constant 1.000000e+00 : f32
    %50 = vector.broadcast %cst_25 : f32 to vector<8x32xf32>
    %51 = arith.subf %49, %50 : vector<8x32xf32>
    %52 = vector.extract_strided_slice %44 {offsets = [0, 96], sizes = [8, 32], strides = [1, 1]} : vector<8x128xf32> to vector<8x32xf32>
    %53 = arith.mulf %46, %13 : vector<8x32xf32>
    %54 = arith.mulf %45, %51 : vector<8x32xf32>
    %55 = arith.addf %53, %54 : vector<8x32xf32>
    %56 = math.tanh %55 : vector<8x32xf32>
    %57 = arith.mulf %52, %56 : vector<8x32xf32>
    %58 = vector.extract_strided_slice %9 {offsets = [8, 0], sizes = [8, 128], strides = [1, 1]} : vector<64x128xf32> to vector<8x128xf32>
    %cst_26 = arith.constant dense<0.000000e+00> : vector<8x128xf32>
    %59 = tpu.matmul %34, %2, %cst_26 {dimension_numbers = #tpu.dot_dimension_numbers<[1], [0], [0], [1], [0, 0, 1, 1], [], []>} : vector<8x32xf32>, vector<32x128xf32>, vector<8x128xf32> -> vector<8x128xf32>
    %60 = arith.addf %58, %59 : vector<8x128xf32>
    %61 = arith.negf %60 : vector<8x128xf32>
    %62 = math.exp %61 : vector<8x128xf32>
    %cst_27 = arith.constant 1.000000e+00 : f32
    %63 = vector.broadcast %cst_27 : f32 to vector<8x128xf32>
    %64 = arith.addf %63, %62 : vector<8x128xf32>
    %65 = arith.divf %63, %64 : vector<8x128xf32>
    %66 = vector.extract_strided_slice %65 {offsets = [0, 0], sizes = [8, 32], strides = [1, 1]} : vector<8x128xf32> to vector<8x32xf32>
    %67 = vector.extract_strided_slice %65 {offsets = [0, 32], sizes = [8, 32], strides = [1, 1]} : vector<8x128xf32> to vector<8x32xf32>
    %68 = vector.extract_strided_slice %65 {offsets = [0, 64], sizes = [8, 32], strides = [1, 1]} : vector<8x128xf32> to vector<8x32xf32>
    %cst_28 = arith.constant 2.000000e+00 : f32
    %69 = vector.broadcast %cst_28 : f32 to vector<8x32xf32>
    %70 = arith.mulf %69, %68 : vector<8x32xf32>
    %cst_29 = arith.constant 1.000000e+00 : f32
    %71 = vector.broadcast %cst_29 : f32 to vector<8x32xf32>
    %72 = arith.subf %70, %71 : vector<8x32xf32>
    %73 = vector.extract_strided_slice %65 {offsets = [0, 96], sizes = [8, 32], strides = [1, 1]} : vector<8x128xf32> to vector<8x32xf32>
    %74 = arith.mulf %67, %32 : vector<8x32xf32>
    %75 = arith.mulf %66, %72 : vector<8x32xf32>
    %76 = arith.addf %74, %75 : vector<8x32xf32>
    %77 = math.tanh %76 : vector<8x32xf32>
    %78 = arith.mulf %73, %77 : vector<8x32xf32>
    %cst_30 = arith.constant dense<0.000000e+00> : vector<8x128xf32>
    %79 = tpu.matmul %78, %1, %cst_30 {dimension_numbers = #tpu.dot_dimension_numbers<[1], [0], [0], [1], [0, 0, 1, 1], [], []>} : vector<8x32xf32>, vector<32x128xf32>, vector<8x128xf32> -> vector<8x128xf32>
    %cst_31 = arith.constant dense<0.000000e+00> : vector<8x128xf32>
    %80 = tpu.matmul %57, %3, %cst_31 {dimension_numbers = #tpu.dot_dimension_numbers<[1], [0], [0], [1], [0, 0, 1, 1], [], []>} : vector<8x32xf32>, vector<32x128xf32>, vector<8x128xf32> -> vector<8x128xf32>
    %81 = arith.addf %79, %80 : vector<8x128xf32>
    %82 = vector.broadcast %5 : vector<1x128xf32> to vector<8x128xf32>
    %83 = arith.addf %81, %82 : vector<8x128xf32>
    %84 = arith.negf %83 : vector<8x128xf32>
    %85 = math.exp %84 : vector<8x128xf32>
    %cst_32 = arith.constant 1.000000e+00 : f32
    %86 = vector.broadcast %cst_32 : f32 to vector<8x128xf32>
    %87 = arith.addf %86, %85 : vector<8x128xf32>
    %88 = arith.divf %86, %87 : vector<8x128xf32>
    %89 = vector.extract_strided_slice %88 {offsets = [0, 0], sizes = [8, 32], strides = [1, 1]} : vector<8x128xf32> to vector<8x32xf32>
    %90 = vector.extract_strided_slice %88 {offsets = [0, 32], sizes = [8, 32], strides = [1, 1]} : vector<8x128xf32> to vector<8x32xf32>
    %91 = vector.extract_strided_slice %88 {offsets = [0, 64], sizes = [8, 32], strides = [1, 1]} : vector<8x128xf32> to vector<8x32xf32>
    %cst_33 = arith.constant 2.000000e+00 : f32
    %92 = vector.broadcast %cst_33 : f32 to vector<8x32xf32>
    %93 = arith.mulf %92, %91 : vector<8x32xf32>
    %cst_34 = arith.constant 1.000000e+00 : f32
    %94 = vector.broadcast %cst_34 : f32 to vector<8x32xf32>
    %95 = arith.subf %93, %94 : vector<8x32xf32>
    %96 = vector.extract_strided_slice %88 {offsets = [0, 96], sizes = [8, 32], strides = [1, 1]} : vector<8x128xf32> to vector<8x32xf32>
    %97 = arith.mulf %90, %55 : vector<8x32xf32>
    %98 = arith.mulf %89, %95 : vector<8x32xf32>
    %99 = arith.addf %97, %98 : vector<8x32xf32>
    %100 = math.tanh %99 : vector<8x32xf32>
    %101 = arith.mulf %96, %100 : vector<8x32xf32>
    %102 = vector.extract_strided_slice %9 {offsets = [16, 0], sizes = [8, 128], strides = [1, 1]} : vector<64x128xf32> to vector<8x128xf32>
    %cst_35 = arith.constant dense<0.000000e+00> : vector<8x128xf32>
    %103 = tpu.matmul %78, %2, %cst_35 {dimension_numbers = #tpu.dot_dimension_numbers<[1], [0], [0], [1], [0, 0, 1, 1], [], []>} : vector<8x32xf32>, vector<32x128xf32>, vector<8x128xf32> -> vector<8x128xf32>
    %104 = arith.addf %102, %103 : vector<8x128xf32>
    %105 = arith.negf %104 : vector<8x128xf32>
    %106 = math.exp %105 : vector<8x128xf32>
    %cst_36 = arith.constant 1.000000e+00 : f32
    %107 = vector.broadcast %cst_36 : f32 to vector<8x128xf32>
    %108 = arith.addf %107, %106 : vector<8x128xf32>
    %109 = arith.divf %107, %108 : vector<8x128xf32>
    %110 = vector.extract_strided_slice %109 {offsets = [0, 0], sizes = [8, 32], strides = [1, 1]} : vector<8x128xf32> to vector<8x32xf32>
    %111 = vector.extract_strided_slice %109 {offsets = [0, 32], sizes = [8, 32], strides = [1, 1]} : vector<8x128xf32> to vector<8x32xf32>
    %112 = vector.extract_strided_slice %109 {offsets = [0, 64], sizes = [8, 32], strides = [1, 1]} : vector<8x128xf32> to vector<8x32xf32>
    %cst_37 = arith.constant 2.000000e+00 : f32
    %113 = vector.broadcast %cst_37 : f32 to vector<8x32xf32>
    %114 = arith.mulf %113, %112 : vector<8x32xf32>
    %cst_38 = arith.constant 1.000000e+00 : f32
    %115 = vector.broadcast %cst_38 : f32 to vector<8x32xf32>
    %116 = arith.subf %114, %115 : vector<8x32xf32>
    %117 = vector.extract_strided_slice %109 {offsets = [0, 96], sizes = [8, 32], strides = [1, 1]} : vector<8x128xf32> to vector<8x32xf32>
    %118 = arith.mulf %111, %76 : vector<8x32xf32>
    %119 = arith.mulf %110, %116 : vector<8x32xf32>
    %120 = arith.addf %118, %119 : vector<8x32xf32>
    %121 = math.tanh %120 : vector<8x32xf32>
    %122 = arith.mulf %117, %121 : vector<8x32xf32>
    %cst_39 = arith.constant dense<0.000000e+00> : vector<8x128xf32>
    %123 = tpu.matmul %122, %1, %cst_39 {dimension_numbers = #tpu.dot_dimension_numbers<[1], [0], [0], [1], [0, 0, 1, 1], [], []>} : vector<8x32xf32>, vector<32x128xf32>, vector<8x128xf32> -> vector<8x128xf32>
    %cst_40 = arith.constant dense<0.000000e+00> : vector<8x128xf32>
    %124 = tpu.matmul %101, %3, %cst_40 {dimension_numbers = #tpu.dot_dimension_numbers<[1], [0], [0], [1], [0, 0, 1, 1], [], []>} : vector<8x32xf32>, vector<32x128xf32>, vector<8x128xf32> -> vector<8x128xf32>
    %125 = arith.addf %123, %124 : vector<8x128xf32>
    %126 = vector.broadcast %5 : vector<1x128xf32> to vector<8x128xf32>
    %127 = arith.addf %125, %126 : vector<8x128xf32>
    %128 = arith.negf %127 : vector<8x128xf32>
    %129 = math.exp %128 : vector<8x128xf32>
    %cst_41 = arith.constant 1.000000e+00 : f32
    %130 = vector.broadcast %cst_41 : f32 to vector<8x128xf32>
    %131 = arith.addf %130, %129 : vector<8x128xf32>
    %132 = arith.divf %130, %131 : vector<8x128xf32>
    %133 = vector.extract_strided_slice %132 {offsets = [0, 0], sizes = [8, 32], strides = [1, 1]} : vector<8x128xf32> to vector<8x32xf32>
    %134 = vector.extract_strided_slice %132 {offsets = [0, 32], sizes = [8, 32], strides = [1, 1]} : vector<8x128xf32> to vector<8x32xf32>
    %135 = vector.extract_strided_slice %132 {offsets = [0, 64], sizes = [8, 32], strides = [1, 1]} : vector<8x128xf32> to vector<8x32xf32>
    %cst_42 = arith.constant 2.000000e+00 : f32
    %136 = vector.broadcast %cst_42 : f32 to vector<8x32xf32>
    %137 = arith.mulf %136, %135 : vector<8x32xf32>
    %cst_43 = arith.constant 1.000000e+00 : f32
    %138 = vector.broadcast %cst_43 : f32 to vector<8x32xf32>
    %139 = arith.subf %137, %138 : vector<8x32xf32>
    %140 = vector.extract_strided_slice %132 {offsets = [0, 96], sizes = [8, 32], strides = [1, 1]} : vector<8x128xf32> to vector<8x32xf32>
    %141 = arith.mulf %134, %99 : vector<8x32xf32>
    %142 = arith.mulf %133, %139 : vector<8x32xf32>
    %143 = arith.addf %141, %142 : vector<8x32xf32>
    %144 = math.tanh %143 : vector<8x32xf32>
    %145 = arith.mulf %140, %144 : vector<8x32xf32>
    %146 = vector.extract_strided_slice %9 {offsets = [24, 0], sizes = [8, 128], strides = [1, 1]} : vector<64x128xf32> to vector<8x128xf32>
    %cst_44 = arith.constant dense<0.000000e+00> : vector<8x128xf32>
    %147 = tpu.matmul %122, %2, %cst_44 {dimension_numbers = #tpu.dot_dimension_numbers<[1], [0], [0], [1], [0, 0, 1, 1], [], []>} : vector<8x32xf32>, vector<32x128xf32>, vector<8x128xf32> -> vector<8x128xf32>
    %148 = arith.addf %146, %147 : vector<8x128xf32>
    %149 = arith.negf %148 : vector<8x128xf32>
    %150 = math.exp %149 : vector<8x128xf32>
    %cst_45 = arith.constant 1.000000e+00 : f32
    %151 = vector.broadcast %cst_45 : f32 to vector<8x128xf32>
    %152 = arith.addf %151, %150 : vector<8x128xf32>
    %153 = arith.divf %151, %152 : vector<8x128xf32>
    %154 = vector.extract_strided_slice %153 {offsets = [0, 0], sizes = [8, 32], strides = [1, 1]} : vector<8x128xf32> to vector<8x32xf32>
    %155 = vector.extract_strided_slice %153 {offsets = [0, 32], sizes = [8, 32], strides = [1, 1]} : vector<8x128xf32> to vector<8x32xf32>
    %156 = vector.extract_strided_slice %153 {offsets = [0, 64], sizes = [8, 32], strides = [1, 1]} : vector<8x128xf32> to vector<8x32xf32>
    %cst_46 = arith.constant 2.000000e+00 : f32
    %157 = vector.broadcast %cst_46 : f32 to vector<8x32xf32>
    %158 = arith.mulf %157, %156 : vector<8x32xf32>
    %cst_47 = arith.constant 1.000000e+00 : f32
    %159 = vector.broadcast %cst_47 : f32 to vector<8x32xf32>
    %160 = arith.subf %158, %159 : vector<8x32xf32>
    %161 = vector.extract_strided_slice %153 {offsets = [0, 96], sizes = [8, 32], strides = [1, 1]} : vector<8x128xf32> to vector<8x32xf32>
    %162 = arith.mulf %155, %120 : vector<8x32xf32>
    %163 = arith.mulf %154, %160 : vector<8x32xf32>
    %164 = arith.addf %162, %163 : vector<8x32xf32>
    %165 = math.tanh %164 : vector<8x32xf32>
    %166 = arith.mulf %161, %165 : vector<8x32xf32>
    %cst_48 = arith.constant dense<0.000000e+00> : vector<8x128xf32>
    %167 = tpu.matmul %166, %1, %cst_48 {dimension_numbers = #tpu.dot_dimension_numbers<[1], [0], [0], [1], [0, 0, 1, 1], [], []>} : vector<8x32xf32>, vector<32x128xf32>, vector<8x128xf32> -> vector<8x128xf32>
    %cst_49 = arith.constant dense<0.000000e+00> : vector<8x128xf32>
    %168 = tpu.matmul %145, %3, %cst_49 {dimension_numbers = #tpu.dot_dimension_numbers<[1], [0], [0], [1], [0, 0, 1, 1], [], []>} : vector<8x32xf32>, vector<32x128xf32>, vector<8x128xf32> -> vector<8x128xf32>
    %169 = arith.addf %167, %168 : vector<8x128xf32>
    %170 = vector.broadcast %5 : vector<1x128xf32> to vector<8x128xf32>
    %171 = arith.addf %169, %170 : vector<8x128xf32>
    %172 = arith.negf %171 : vector<8x128xf32>
    %173 = math.exp %172 : vector<8x128xf32>
    %cst_50 = arith.constant 1.000000e+00 : f32
    %174 = vector.broadcast %cst_50 : f32 to vector<8x128xf32>
    %175 = arith.addf %174, %173 : vector<8x128xf32>
    %176 = arith.divf %174, %175 : vector<8x128xf32>
    %177 = vector.extract_strided_slice %176 {offsets = [0, 0], sizes = [8, 32], strides = [1, 1]} : vector<8x128xf32> to vector<8x32xf32>
    %178 = vector.extract_strided_slice %176 {offsets = [0, 32], sizes = [8, 32], strides = [1, 1]} : vector<8x128xf32> to vector<8x32xf32>
    %179 = vector.extract_strided_slice %176 {offsets = [0, 64], sizes = [8, 32], strides = [1, 1]} : vector<8x128xf32> to vector<8x32xf32>
    %cst_51 = arith.constant 2.000000e+00 : f32
    %180 = vector.broadcast %cst_51 : f32 to vector<8x32xf32>
    %181 = arith.mulf %180, %179 : vector<8x32xf32>
    %cst_52 = arith.constant 1.000000e+00 : f32
    %182 = vector.broadcast %cst_52 : f32 to vector<8x32xf32>
    %183 = arith.subf %181, %182 : vector<8x32xf32>
    %184 = vector.extract_strided_slice %176 {offsets = [0, 96], sizes = [8, 32], strides = [1, 1]} : vector<8x128xf32> to vector<8x32xf32>
    %185 = arith.mulf %178, %143 : vector<8x32xf32>
    %186 = arith.mulf %177, %183 : vector<8x32xf32>
    %187 = arith.addf %185, %186 : vector<8x32xf32>
    %188 = math.tanh %187 : vector<8x32xf32>
    %189 = arith.mulf %184, %188 : vector<8x32xf32>
    %190 = vector.extract_strided_slice %9 {offsets = [32, 0], sizes = [8, 128], strides = [1, 1]} : vector<64x128xf32> to vector<8x128xf32>
    %cst_53 = arith.constant dense<0.000000e+00> : vector<8x128xf32>
    %191 = tpu.matmul %166, %2, %cst_53 {dimension_numbers = #tpu.dot_dimension_numbers<[1], [0], [0], [1], [0, 0, 1, 1], [], []>} : vector<8x32xf32>, vector<32x128xf32>, vector<8x128xf32> -> vector<8x128xf32>
    %192 = arith.addf %190, %191 : vector<8x128xf32>
    %193 = arith.negf %192 : vector<8x128xf32>
    %194 = math.exp %193 : vector<8x128xf32>
    %cst_54 = arith.constant 1.000000e+00 : f32
    %195 = vector.broadcast %cst_54 : f32 to vector<8x128xf32>
    %196 = arith.addf %195, %194 : vector<8x128xf32>
    %197 = arith.divf %195, %196 : vector<8x128xf32>
    %198 = vector.extract_strided_slice %197 {offsets = [0, 0], sizes = [8, 32], strides = [1, 1]} : vector<8x128xf32> to vector<8x32xf32>
    %199 = vector.extract_strided_slice %197 {offsets = [0, 32], sizes = [8, 32], strides = [1, 1]} : vector<8x128xf32> to vector<8x32xf32>
    %200 = vector.extract_strided_slice %197 {offsets = [0, 64], sizes = [8, 32], strides = [1, 1]} : vector<8x128xf32> to vector<8x32xf32>
    %cst_55 = arith.constant 2.000000e+00 : f32
    %201 = vector.broadcast %cst_55 : f32 to vector<8x32xf32>
    %202 = arith.mulf %201, %200 : vector<8x32xf32>
    %cst_56 = arith.constant 1.000000e+00 : f32
    %203 = vector.broadcast %cst_56 : f32 to vector<8x32xf32>
    %204 = arith.subf %202, %203 : vector<8x32xf32>
    %205 = vector.extract_strided_slice %197 {offsets = [0, 96], sizes = [8, 32], strides = [1, 1]} : vector<8x128xf32> to vector<8x32xf32>
    %206 = arith.mulf %199, %164 : vector<8x32xf32>
    %207 = arith.mulf %198, %204 : vector<8x32xf32>
    %208 = arith.addf %206, %207 : vector<8x32xf32>
    %209 = math.tanh %208 : vector<8x32xf32>
    %210 = arith.mulf %205, %209 : vector<8x32xf32>
    %cst_57 = arith.constant dense<0.000000e+00> : vector<8x128xf32>
    %211 = tpu.matmul %210, %1, %cst_57 {dimension_numbers = #tpu.dot_dimension_numbers<[1], [0], [0], [1], [0, 0, 1, 1], [], []>} : vector<8x32xf32>, vector<32x128xf32>, vector<8x128xf32> -> vector<8x128xf32>
    %cst_58 = arith.constant dense<0.000000e+00> : vector<8x128xf32>
    %212 = tpu.matmul %189, %3, %cst_58 {dimension_numbers = #tpu.dot_dimension_numbers<[1], [0], [0], [1], [0, 0, 1, 1], [], []>} : vector<8x32xf32>, vector<32x128xf32>, vector<8x128xf32> -> vector<8x128xf32>
    %213 = arith.addf %211, %212 : vector<8x128xf32>
    %214 = vector.broadcast %5 : vector<1x128xf32> to vector<8x128xf32>
    %215 = arith.addf %213, %214 : vector<8x128xf32>
    %216 = arith.negf %215 : vector<8x128xf32>
    %217 = math.exp %216 : vector<8x128xf32>
    %cst_59 = arith.constant 1.000000e+00 : f32
    %218 = vector.broadcast %cst_59 : f32 to vector<8x128xf32>
    %219 = arith.addf %218, %217 : vector<8x128xf32>
    %220 = arith.divf %218, %219 : vector<8x128xf32>
    %221 = vector.extract_strided_slice %220 {offsets = [0, 0], sizes = [8, 32], strides = [1, 1]} : vector<8x128xf32> to vector<8x32xf32>
    %222 = vector.extract_strided_slice %220 {offsets = [0, 32], sizes = [8, 32], strides = [1, 1]} : vector<8x128xf32> to vector<8x32xf32>
    %223 = vector.extract_strided_slice %220 {offsets = [0, 64], sizes = [8, 32], strides = [1, 1]} : vector<8x128xf32> to vector<8x32xf32>
    %cst_60 = arith.constant 2.000000e+00 : f32
    %224 = vector.broadcast %cst_60 : f32 to vector<8x32xf32>
    %225 = arith.mulf %224, %223 : vector<8x32xf32>
    %cst_61 = arith.constant 1.000000e+00 : f32
    %226 = vector.broadcast %cst_61 : f32 to vector<8x32xf32>
    %227 = arith.subf %225, %226 : vector<8x32xf32>
    %228 = vector.extract_strided_slice %220 {offsets = [0, 96], sizes = [8, 32], strides = [1, 1]} : vector<8x128xf32> to vector<8x32xf32>
    %229 = arith.mulf %222, %187 : vector<8x32xf32>
    %230 = arith.mulf %221, %227 : vector<8x32xf32>
    %231 = arith.addf %229, %230 : vector<8x32xf32>
    %232 = math.tanh %231 : vector<8x32xf32>
    %233 = arith.mulf %228, %232 : vector<8x32xf32>
    %234 = vector.extract_strided_slice %9 {offsets = [40, 0], sizes = [8, 128], strides = [1, 1]} : vector<64x128xf32> to vector<8x128xf32>
    %cst_62 = arith.constant dense<0.000000e+00> : vector<8x128xf32>
    %235 = tpu.matmul %210, %2, %cst_62 {dimension_numbers = #tpu.dot_dimension_numbers<[1], [0], [0], [1], [0, 0, 1, 1], [], []>} : vector<8x32xf32>, vector<32x128xf32>, vector<8x128xf32> -> vector<8x128xf32>
    %236 = arith.addf %234, %235 : vector<8x128xf32>
    %237 = arith.negf %236 : vector<8x128xf32>
    %238 = math.exp %237 : vector<8x128xf32>
    %cst_63 = arith.constant 1.000000e+00 : f32
    %239 = vector.broadcast %cst_63 : f32 to vector<8x128xf32>
    %240 = arith.addf %239, %238 : vector<8x128xf32>
    %241 = arith.divf %239, %240 : vector<8x128xf32>
    %242 = vector.extract_strided_slice %241 {offsets = [0, 0], sizes = [8, 32], strides = [1, 1]} : vector<8x128xf32> to vector<8x32xf32>
    %243 = vector.extract_strided_slice %241 {offsets = [0, 32], sizes = [8, 32], strides = [1, 1]} : vector<8x128xf32> to vector<8x32xf32>
    %244 = vector.extract_strided_slice %241 {offsets = [0, 64], sizes = [8, 32], strides = [1, 1]} : vector<8x128xf32> to vector<8x32xf32>
    %cst_64 = arith.constant 2.000000e+00 : f32
    %245 = vector.broadcast %cst_64 : f32 to vector<8x32xf32>
    %246 = arith.mulf %245, %244 : vector<8x32xf32>
    %cst_65 = arith.constant 1.000000e+00 : f32
    %247 = vector.broadcast %cst_65 : f32 to vector<8x32xf32>
    %248 = arith.subf %246, %247 : vector<8x32xf32>
    %249 = vector.extract_strided_slice %241 {offsets = [0, 96], sizes = [8, 32], strides = [1, 1]} : vector<8x128xf32> to vector<8x32xf32>
    %250 = arith.mulf %243, %208 : vector<8x32xf32>
    %251 = arith.mulf %242, %248 : vector<8x32xf32>
    %252 = arith.addf %250, %251 : vector<8x32xf32>
    %253 = math.tanh %252 : vector<8x32xf32>
    %254 = arith.mulf %249, %253 : vector<8x32xf32>
    %cst_66 = arith.constant dense<0.000000e+00> : vector<8x128xf32>
    %255 = tpu.matmul %254, %1, %cst_66 {dimension_numbers = #tpu.dot_dimension_numbers<[1], [0], [0], [1], [0, 0, 1, 1], [], []>} : vector<8x32xf32>, vector<32x128xf32>, vector<8x128xf32> -> vector<8x128xf32>
    %cst_67 = arith.constant dense<0.000000e+00> : vector<8x128xf32>
    %256 = tpu.matmul %233, %3, %cst_67 {dimension_numbers = #tpu.dot_dimension_numbers<[1], [0], [0], [1], [0, 0, 1, 1], [], []>} : vector<8x32xf32>, vector<32x128xf32>, vector<8x128xf32> -> vector<8x128xf32>
    %257 = arith.addf %255, %256 : vector<8x128xf32>
    %258 = vector.broadcast %5 : vector<1x128xf32> to vector<8x128xf32>
    %259 = arith.addf %257, %258 : vector<8x128xf32>
    %260 = arith.negf %259 : vector<8x128xf32>
    %261 = math.exp %260 : vector<8x128xf32>
    %cst_68 = arith.constant 1.000000e+00 : f32
    %262 = vector.broadcast %cst_68 : f32 to vector<8x128xf32>
    %263 = arith.addf %262, %261 : vector<8x128xf32>
    %264 = arith.divf %262, %263 : vector<8x128xf32>
    %265 = vector.extract_strided_slice %264 {offsets = [0, 0], sizes = [8, 32], strides = [1, 1]} : vector<8x128xf32> to vector<8x32xf32>
    %266 = vector.extract_strided_slice %264 {offsets = [0, 32], sizes = [8, 32], strides = [1, 1]} : vector<8x128xf32> to vector<8x32xf32>
    %267 = vector.extract_strided_slice %264 {offsets = [0, 64], sizes = [8, 32], strides = [1, 1]} : vector<8x128xf32> to vector<8x32xf32>
    %cst_69 = arith.constant 2.000000e+00 : f32
    %268 = vector.broadcast %cst_69 : f32 to vector<8x32xf32>
    %269 = arith.mulf %268, %267 : vector<8x32xf32>
    %cst_70 = arith.constant 1.000000e+00 : f32
    %270 = vector.broadcast %cst_70 : f32 to vector<8x32xf32>
    %271 = arith.subf %269, %270 : vector<8x32xf32>
    %272 = vector.extract_strided_slice %264 {offsets = [0, 96], sizes = [8, 32], strides = [1, 1]} : vector<8x128xf32> to vector<8x32xf32>
    %273 = arith.mulf %266, %231 : vector<8x32xf32>
    %274 = arith.mulf %265, %271 : vector<8x32xf32>
    %275 = arith.addf %273, %274 : vector<8x32xf32>
    %276 = math.tanh %275 : vector<8x32xf32>
    %277 = arith.mulf %272, %276 : vector<8x32xf32>
    %278 = vector.extract_strided_slice %9 {offsets = [48, 0], sizes = [8, 128], strides = [1, 1]} : vector<64x128xf32> to vector<8x128xf32>
    %cst_71 = arith.constant dense<0.000000e+00> : vector<8x128xf32>
    %279 = tpu.matmul %254, %2, %cst_71 {dimension_numbers = #tpu.dot_dimension_numbers<[1], [0], [0], [1], [0, 0, 1, 1], [], []>} : vector<8x32xf32>, vector<32x128xf32>, vector<8x128xf32> -> vector<8x128xf32>
    %280 = arith.addf %278, %279 : vector<8x128xf32>
    %281 = arith.negf %280 : vector<8x128xf32>
    %282 = math.exp %281 : vector<8x128xf32>
    %cst_72 = arith.constant 1.000000e+00 : f32
    %283 = vector.broadcast %cst_72 : f32 to vector<8x128xf32>
    %284 = arith.addf %283, %282 : vector<8x128xf32>
    %285 = arith.divf %283, %284 : vector<8x128xf32>
    %286 = vector.extract_strided_slice %285 {offsets = [0, 0], sizes = [8, 32], strides = [1, 1]} : vector<8x128xf32> to vector<8x32xf32>
    %287 = vector.extract_strided_slice %285 {offsets = [0, 32], sizes = [8, 32], strides = [1, 1]} : vector<8x128xf32> to vector<8x32xf32>
    %288 = vector.extract_strided_slice %285 {offsets = [0, 64], sizes = [8, 32], strides = [1, 1]} : vector<8x128xf32> to vector<8x32xf32>
    %cst_73 = arith.constant 2.000000e+00 : f32
    %289 = vector.broadcast %cst_73 : f32 to vector<8x32xf32>
    %290 = arith.mulf %289, %288 : vector<8x32xf32>
    %cst_74 = arith.constant 1.000000e+00 : f32
    %291 = vector.broadcast %cst_74 : f32 to vector<8x32xf32>
    %292 = arith.subf %290, %291 : vector<8x32xf32>
    %293 = vector.extract_strided_slice %285 {offsets = [0, 96], sizes = [8, 32], strides = [1, 1]} : vector<8x128xf32> to vector<8x32xf32>
    %294 = arith.mulf %287, %252 : vector<8x32xf32>
    %295 = arith.mulf %286, %292 : vector<8x32xf32>
    %296 = arith.addf %294, %295 : vector<8x32xf32>
    %297 = math.tanh %296 : vector<8x32xf32>
    %298 = arith.mulf %293, %297 : vector<8x32xf32>
    %cst_75 = arith.constant dense<0.000000e+00> : vector<8x128xf32>
    %299 = tpu.matmul %298, %1, %cst_75 {dimension_numbers = #tpu.dot_dimension_numbers<[1], [0], [0], [1], [0, 0, 1, 1], [], []>} : vector<8x32xf32>, vector<32x128xf32>, vector<8x128xf32> -> vector<8x128xf32>
    %cst_76 = arith.constant dense<0.000000e+00> : vector<8x128xf32>
    %300 = tpu.matmul %277, %3, %cst_76 {dimension_numbers = #tpu.dot_dimension_numbers<[1], [0], [0], [1], [0, 0, 1, 1], [], []>} : vector<8x32xf32>, vector<32x128xf32>, vector<8x128xf32> -> vector<8x128xf32>
    %301 = arith.addf %299, %300 : vector<8x128xf32>
    %302 = vector.broadcast %5 : vector<1x128xf32> to vector<8x128xf32>
    %303 = arith.addf %301, %302 : vector<8x128xf32>
    %304 = arith.negf %303 : vector<8x128xf32>
    %305 = math.exp %304 : vector<8x128xf32>
    %cst_77 = arith.constant 1.000000e+00 : f32
    %306 = vector.broadcast %cst_77 : f32 to vector<8x128xf32>
    %307 = arith.addf %306, %305 : vector<8x128xf32>
    %308 = arith.divf %306, %307 : vector<8x128xf32>
    %309 = vector.extract_strided_slice %308 {offsets = [0, 0], sizes = [8, 32], strides = [1, 1]} : vector<8x128xf32> to vector<8x32xf32>
    %310 = vector.extract_strided_slice %308 {offsets = [0, 32], sizes = [8, 32], strides = [1, 1]} : vector<8x128xf32> to vector<8x32xf32>
    %311 = vector.extract_strided_slice %308 {offsets = [0, 64], sizes = [8, 32], strides = [1, 1]} : vector<8x128xf32> to vector<8x32xf32>
    %cst_78 = arith.constant 2.000000e+00 : f32
    %312 = vector.broadcast %cst_78 : f32 to vector<8x32xf32>
    %313 = arith.mulf %312, %311 : vector<8x32xf32>
    %cst_79 = arith.constant 1.000000e+00 : f32
    %314 = vector.broadcast %cst_79 : f32 to vector<8x32xf32>
    %315 = arith.subf %313, %314 : vector<8x32xf32>
    %316 = vector.extract_strided_slice %308 {offsets = [0, 96], sizes = [8, 32], strides = [1, 1]} : vector<8x128xf32> to vector<8x32xf32>
    %317 = arith.mulf %310, %275 : vector<8x32xf32>
    %318 = arith.mulf %309, %315 : vector<8x32xf32>
    %319 = arith.addf %317, %318 : vector<8x32xf32>
    %320 = math.tanh %319 : vector<8x32xf32>
    %321 = arith.mulf %316, %320 : vector<8x32xf32>
    %322 = vector.extract_strided_slice %9 {offsets = [56, 0], sizes = [8, 128], strides = [1, 1]} : vector<64x128xf32> to vector<8x128xf32>
    %cst_80 = arith.constant dense<0.000000e+00> : vector<8x128xf32>
    %323 = tpu.matmul %298, %2, %cst_80 {dimension_numbers = #tpu.dot_dimension_numbers<[1], [0], [0], [1], [0, 0, 1, 1], [], []>} : vector<8x32xf32>, vector<32x128xf32>, vector<8x128xf32> -> vector<8x128xf32>
    %324 = arith.addf %322, %323 : vector<8x128xf32>
    %325 = arith.negf %324 : vector<8x128xf32>
    %326 = math.exp %325 : vector<8x128xf32>
    %cst_81 = arith.constant 1.000000e+00 : f32
    %327 = vector.broadcast %cst_81 : f32 to vector<8x128xf32>
    %328 = arith.addf %327, %326 : vector<8x128xf32>
    %329 = arith.divf %327, %328 : vector<8x128xf32>
    %330 = vector.extract_strided_slice %329 {offsets = [0, 0], sizes = [8, 32], strides = [1, 1]} : vector<8x128xf32> to vector<8x32xf32>
    %331 = vector.extract_strided_slice %329 {offsets = [0, 32], sizes = [8, 32], strides = [1, 1]} : vector<8x128xf32> to vector<8x32xf32>
    %332 = vector.extract_strided_slice %329 {offsets = [0, 64], sizes = [8, 32], strides = [1, 1]} : vector<8x128xf32> to vector<8x32xf32>
    %cst_82 = arith.constant 2.000000e+00 : f32
    %333 = vector.broadcast %cst_82 : f32 to vector<8x32xf32>
    %334 = arith.mulf %333, %332 : vector<8x32xf32>
    %cst_83 = arith.constant 1.000000e+00 : f32
    %335 = vector.broadcast %cst_83 : f32 to vector<8x32xf32>
    %336 = arith.subf %334, %335 : vector<8x32xf32>
    %337 = vector.extract_strided_slice %329 {offsets = [0, 96], sizes = [8, 32], strides = [1, 1]} : vector<8x128xf32> to vector<8x32xf32>
    %338 = arith.mulf %331, %296 : vector<8x32xf32>
    %339 = arith.mulf %330, %336 : vector<8x32xf32>
    %340 = arith.addf %338, %339 : vector<8x32xf32>
    %341 = math.tanh %340 : vector<8x32xf32>
    %342 = arith.mulf %337, %341 : vector<8x32xf32>
    %cst_84 = arith.constant dense<0.000000e+00> : vector<8x128xf32>
    %343 = tpu.matmul %342, %1, %cst_84 {dimension_numbers = #tpu.dot_dimension_numbers<[1], [0], [0], [1], [0, 0, 1, 1], [], []>} : vector<8x32xf32>, vector<32x128xf32>, vector<8x128xf32> -> vector<8x128xf32>
    %cst_85 = arith.constant dense<0.000000e+00> : vector<8x128xf32>
    %344 = tpu.matmul %321, %3, %cst_85 {dimension_numbers = #tpu.dot_dimension_numbers<[1], [0], [0], [1], [0, 0, 1, 1], [], []>} : vector<8x32xf32>, vector<32x128xf32>, vector<8x128xf32> -> vector<8x128xf32>
    %345 = arith.addf %343, %344 : vector<8x128xf32>
    %346 = vector.broadcast %5 : vector<1x128xf32> to vector<8x128xf32>
    %347 = arith.addf %345, %346 : vector<8x128xf32>
    %348 = arith.negf %347 : vector<8x128xf32>
    %349 = math.exp %348 : vector<8x128xf32>
    %cst_86 = arith.constant 1.000000e+00 : f32
    %350 = vector.broadcast %cst_86 : f32 to vector<8x128xf32>
    %351 = arith.addf %350, %349 : vector<8x128xf32>
    %352 = arith.divf %350, %351 : vector<8x128xf32>
    %353 = vector.extract_strided_slice %352 {offsets = [0, 0], sizes = [8, 32], strides = [1, 1]} : vector<8x128xf32> to vector<8x32xf32>
    %354 = vector.extract_strided_slice %352 {offsets = [0, 32], sizes = [8, 32], strides = [1, 1]} : vector<8x128xf32> to vector<8x32xf32>
    %355 = vector.extract_strided_slice %352 {offsets = [0, 64], sizes = [8, 32], strides = [1, 1]} : vector<8x128xf32> to vector<8x32xf32>
    %cst_87 = arith.constant 2.000000e+00 : f32
    %356 = vector.broadcast %cst_87 : f32 to vector<8x32xf32>
    %357 = arith.mulf %356, %355 : vector<8x32xf32>
    %cst_88 = arith.constant 1.000000e+00 : f32
    %358 = vector.broadcast %cst_88 : f32 to vector<8x32xf32>
    %359 = arith.subf %357, %358 : vector<8x32xf32>
    %360 = vector.extract_strided_slice %352 {offsets = [0, 96], sizes = [8, 32], strides = [1, 1]} : vector<8x128xf32> to vector<8x32xf32>
    %361 = arith.mulf %354, %319 : vector<8x32xf32>
    %362 = arith.mulf %353, %359 : vector<8x32xf32>
    %363 = arith.addf %361, %362 : vector<8x32xf32>
    %364 = math.tanh %363 : vector<8x32xf32>
    %365 = arith.mulf %360, %364 : vector<8x32xf32>
    %c0_89 = arith.constant 0 : index
    %c0_90 = arith.constant 0 : index
    %366 = vector.load %arg7[%c0_89, %c0_90] : memref<32x128xf32, #tpu.memory_space<vmem>>, vector<32x128xf32>
    %cst_91 = arith.constant dense<0.000000e+00> : vector<8x128xf32>
    %367 = tpu.matmul %365, %366, %cst_91 {dimension_numbers = #tpu.dot_dimension_numbers<[1], [0], [0], [1], [0, 0, 1, 1], [], []>} : vector<8x32xf32>, vector<32x128xf32>, vector<8x128xf32> -> vector<8x128xf32>
    %c0_92 = arith.constant 0 : index
    %c0_93 = arith.constant 0 : index
    %368 = vector.load %arg8[%c0_92, %c0_93] : memref<1x128xf32, #tpu.memory_space<vmem>>, vector<1x128xf32>
    %369 = vector.broadcast %368 : vector<1x128xf32> to vector<8x128xf32>
    %370 = arith.addf %367, %369 : vector<8x128xf32>
    %c0_94 = arith.constant 0 : index
    %c0_95 = arith.constant 0 : index
    %371 = vector.load %arg9[%c0_94, %c0_95] : memref<8x128xf32, #tpu.memory_space<vmem>>, vector<8x128xf32>
    tpu.vector_store %arg9[%c0_94, %c0_95], %370 {strides = array<i32>} : memref<8x128xf32, #tpu.memory_space<vmem>>, vector<8x128xf32>,
    return
  }
}

</mosaic_0001>

<llo_original>
// kernel: lstm_model_forward.1
$region0: #{lstm_model_forward.1}
  #allocation0 [shape = 'u32[]', space=smem, size = 0x4, offset = 0x4, fixed_abs, tag = 'smem constant byte address 0x4 - core index']
  #allocation1 [shape = 'u32[144,128]{1,0:T(1,128)}', space=vmem, size = 0x12000, scoped, tag = 'internal scratch']
  %s0 = inlined_call_operand.vmem [shape: f32[64,3], index: 0, kind: input, shape index: {}]
  %s1 = inlined_call_operand.vmem [shape: f32[3,128], index: 1, kind: input, shape index: {}]
  %s2 = inlined_call_operand.vmem [shape: f32[32,128], index: 2, kind: input, shape index: {}]
  %s3 = inlined_call_operand.vmem [shape: f32[1,128], index: 3, kind: input, shape index: {}]
  %s4 = inlined_call_operand.vmem [shape: f32[32,128], index: 4, kind: input, shape index: {}]
  %s5 = inlined_call_operand.vmem [shape: f32[32,128], index: 5, kind: input, shape index: {}]
  %s6 = inlined_call_operand.hbm [shape: f32[1,128], index: 6, kind: input, shape index: {}]
  %s7 = inlined_call_operand.vmem [shape: f32[32,128], index: 7, kind: input, shape index: {}]
  %s8 = inlined_call_operand.hbm [shape: f32[1,128], index: 8, kind: input, shape index: {}]
  %s9 = inlined_call_operand.vmem [shape: f32[8,128], index: 9, kind: output, shape index: {}]
  %s10 = sld [smem:[#allocation0]]
  $region54: #{lstm_model_forward.1} parent=0
    _
  %s12 = ssub.s32 1, %s10
  %s13 = scalar_select 0, %s12, %s10
  $region1: #{lstm_model_forward.1} parent=0
    #allocation2 [shape = 'u8[512]{0}', space=vmem, size = 0x400, scoped, tag = 'input window, operand 6, single buffered']
    #allocation3 [shape = 's32[1]{0}', space=sflag, size = 0x4, scoped, tag = 'scoped memory for lstm_model_forward.1']
    #allocation4 [shape = 'u8[512]{0}', space=vmem, size = 0x400, scoped, tag = 'input window, operand 8, single buffered']
    #allocation5 [shape = 's32[1]{0}', space=sflag, size = 0x4, scoped, tag = 'scoped memory for lstm_model_forward.1']
    %14 = vsyncpa [#allocation3], 0
    %15 = vsyncpa [#allocation5], 0
    // Predicated region
    $region2: #{lstm_model_forward.1} parent=1 // pred_check
      _
    $region3: #{lstm_model_forward.1} parent=1 // pred_check_branch
      %17 = sbr.rel (0) target = $region5
    $region4: #{lstm_model_forward.1} parent=1 // pred_region
      _
    $region5: #{lstm_model_forward.1} parent=1 // pred_fallthru
      _
    // Predicated region
    $region6: #{lstm_model_forward.1} parent=1 // pred_check
      _
    $region7: #{lstm_model_forward.1} parent=1 // pred_check_branch
      %19 = sbr.rel (0) target = $region9
    $region8: #{lstm_model_forward.1} parent=1 // pred_region
      _
    $region9: #{lstm_model_forward.1} parent=1 // pred_fallthru
      _
    // Predicated region
    $region10: #{lstm_model_forward.1} parent=1 // pred_check
      _
    $region11: #{lstm_model_forward.1} parent=1 // pred_check_branch
      %21 = sbr.rel (0) target = $region13
    $region12: #{lstm_model_forward.1} parent=1 // pred_region
      _
    $region13: #{lstm_model_forward.1} parent=1 // pred_fallthru
      _
    // Predicated region
    $region14: #{lstm_model_forward.1} parent=1 // pred_check
      _
    $region15: #{lstm_model_forward.1} parent=1 // pred_check_branch
      %23 = sbr.rel (0) target = $region17
    $region16: #{lstm_model_forward.1} parent=1 // pred_region
      _
    $region17: #{lstm_model_forward.1} parent=1 // pred_fallthru
      _
    // Predicated region
    $region18: #{lstm_model_forward.1} parent=1 // pred_check
      _
    $region19: #{lstm_model_forward.1} parent=1 // pred_check_branch
      %25 = sbr.rel (0) target = $region21
    $region20: #{lstm_model_forward.1} parent=1 // pred_region
      _
    $region21: #{lstm_model_forward.1} parent=1 // pred_fallthru
      _
    // Predicated region
    $region22: #{lstm_model_forward.1} parent=1 // pred_check
      _
    $region23: #{lstm_model_forward.1} parent=1 // pred_check_branch
      %27 = sbr.rel (0) target = $region25
    $region24: #{lstm_model_forward.1} parent=1 // pred_region
      _
    $region25: #{lstm_model_forward.1} parent=1 // pred_fallthru
      _
    // Predicated region
    $region26: #{lstm_model_forward.1} parent=1 // pred_check
      _
    $region27: #{lstm_model_forward.1} parent=1 // pred_check_branch
      %29 = sbr.rel (0) target = $region29
    $region28: #{lstm_model_forward.1} parent=1 // pred_region
      %s31 = ssub.s32 16, 16
      %32 = vsyncadd [#allocation3], %s31
      %s34 = sshll.u32 [#allocation2], 4
      %s35 = int_to_ptr.vmem [resolvable:$true] %s34
      %37 = dma.hbm_to_vmem [thread:$0]  %s6, 16, %s35, [#allocation3]
    $region29: #{lstm_model_forward.1} parent=1 // pred_fallthru
      _
    // Predicated region
    $region30: #{lstm_model_forward.1} parent=1 // pred_check
      _
    $region31: #{lstm_model_forward.1} parent=1 // pred_check_branch
      %39 = sbr.rel (0) target = $region33
    $region32: #{lstm_model_forward.1} parent=1 // pred_region
      _
    $region33: #{lstm_model_forward.1} parent=1 // pred_fallthru
      _
    // Predicated region
    $region34: #{lstm_model_forward.1} parent=1 // pred_check
      _
    $region35: #{lstm_model_forward.1} parent=1 // pred_check_branch
      %41 = sbr.rel (0) target = $region37
    $region36: #{lstm_model_forward.1} parent=1 // pred_region
      %s43 = ssub.s32 16, 16
      %44 = vsyncadd [#allocation5], %s43
      %s46 = sshll.u32 [#allocation4], 4
      %s47 = int_to_ptr.vmem [resolvable:$true] %s46
      %49 = dma.hbm_to_vmem [thread:$0]  %s8, 16, %s47, [#allocation5]
    $region37: #{lstm_model_forward.1} parent=1 // pred_fallthru
      _
    // Predicated region
    $region38: #{lstm_model_forward.1} parent=1 // pred_check
      _
    $region39: #{lstm_model_forward.1} parent=1 // pred_check_branch
      %51 = sbr.rel (0) target = $region41
    $region40: #{lstm_model_forward.1} parent=1 // pred_region
      %52 = dma.done [#allocation3], 16
    $region41: #{lstm_model_forward.1} parent=1 // pred_fallthru
      _
    // Predicated region
    $region42: #{lstm_model_forward.1} parent=1 // pred_check
      _
    $region43: #{lstm_model_forward.1} parent=1 // pred_check_branch
      %54 = sbr.rel (0) target = $region45
    $region44: #{lstm_model_forward.1} parent=1 // pred_region
      %55 = dma.done [#allocation5], 16
    $region45: #{lstm_model_forward.1} parent=1 // pred_fallthru
      _
    %v56 = vld [vmem:[%s1] sm:$0x7]
    %v57 = vld [vmem:[%s4] sm:$0xff]
    %v58 = vld [vmem:[%s4 + $0x8] sm:$0xff]
    %v59 = vld [vmem:[%s4 + $0x10] sm:$0xff]
    %v60 = vld [vmem:[%s4 + $0x18] sm:$0xff]
    %v61 = vld [vmem:[%s2] sm:$0xff]
    %v62 = vld [vmem:[%s2 + $0x8] sm:$0xff]
    %v63 = vld [vmem:[%s2 + $0x10] sm:$0xff]
    %v64 = vld [vmem:[%s2 + $0x18] sm:$0xff]
    %v65 = vld [vmem:[%s5] sm:$0xff]
    %v66 = vld [vmem:[%s5 + $0x8] sm:$0xff]
    %v67 = vld [vmem:[%s5 + $0x10] sm:$0xff]
    %v68 = vld [vmem:[%s5 + $0x18] sm:$0xff]
    %v69 = vld [vmem:[%s3] sm:$0x1]
    %v70 = vld [vmem:[#allocation2] sm:$0x1]
    %v71 = vld [vmem:[%s0] sm:$0xff]
    %v72 = vld [vmem:[%s0 + $0x8] sm:$0xff]
    %v73 = vld [vmem:[%s0 + $0x10] sm:$0xff]
    %v74 = vld [vmem:[%s0 + $0x18] sm:$0xff]
    %v75 = vld [vmem:[%s0 + $0x20] sm:$0xff]
    %v76 = vld [vmem:[%s0 + $0x28] sm:$0xff]
    %v77 = vld [vmem:[%s0 + $0x30] sm:$0xff]
    %v78 = vld [vmem:[%s0 + $0x38] sm:$0xff]
    %v80 = vlaneseq
    %v81 = vshrl.u32 %v80, 7
    %v82 = vsub.s32 0, %v81
    %v83 = vrot.slane %v69, %v82
    %vm85 = vcmask 23552
    %v87 = vsel %vm85, %v71, 0
    %v90 = vsel %vm85, %v72, 0
    %v93 = vsel %vm85, %v73, 0
    %v96 = vsel %vm85, %v74, 0
    %v99 = vsel %vm85, %v75, 0
    %v102 = vsel %vm85, %v76, 0
    %v105 = vsel %vm85, %v77, 0
    %v108 = vsel %vm85, %v78, 0
    %vm110 = vcmask 1042432
    %v112 = vsel %vm110, %v56, 0
    %114 = vmatprep.subr.mxu0 0.0
    %115 = vmatpush1.msra.mxu0 %v112
    %116 = vmatprep.subr.mxu0 0.0
    %117 = vmatpush1.msra.mxu0 0.0
    %118 = vmatprep.subr.mxu0 0.0
    %119 = vmatpush1.msra.mxu0 0.0
    %120 = vmatprep.subr.mxu0 0.0
    %121 = vmatpush1.msra.mxu0 0.0
    %122 = vmatprep.subr.mxu0 0.0
    %123 = vmatpush1.msra.mxu0 0.0
    %124 = vmatprep.subr.mxu0 0.0
    %125 = vmatpush1.msra.mxu0 0.0
    %126 = vmatprep.subr.mxu0 0.0
    %127 = vmatpush1.msra.mxu0 0.0
    %128 = vmatprep.subr.mxu0 0.0
    %129 = vmatpush1.msra.mxu0 0.0
    %130 = vmatprep.subr.mxu0 0.0
    %131 = vmatpush1.msra.mxu0 0.0
    %132 = vmatprep.subr.mxu0 0.0
    %133 = vmatpush1.msra.mxu0 0.0
    %134 = vmatprep.subr.mxu0 0.0
    %135 = vmatpush1.msra.mxu0 0.0
    %136 = vmatprep.subr.mxu0 0.0
    %137 = vmatpush1.msra.mxu0 0.0
    %138 = vmatprep.subr.mxu0 0.0
    %139 = vmatpush1.msra.mxu0 0.0
    %140 = vmatprep.subr.mxu0 0.0
    %141 = vmatpush1.msra.mxu0 0.0
    %142 = vmatprep.subr.mxu0 0.0
    %143 = vmatpush1.msra.mxu0 0.0
    %144 = vmatprep.subr.mxu0 0.0
    %145 = vmatpush1.msra.mxu0 0.0
    %146 = vmatprep.subr.mxu0 0.0
    %147 = vmatpush1.msra.mxu0 0.0
    %148 = vmatprep.subr.mxu0 0.0
    %149 = vmatpush1.msra.mxu0 0.0
    %150 = vmatprep.subr.mxu0 0.0
    %151 = vmatpush1.msra.mxu0 0.0
    %152 = vmatprep.subr.mxu0 0.0
    %153 = vmatpush1.msra.mxu0 0.0
    %154 = vmatprep.subr.mxu0 0.0
    %155 = vmatpush1.msra.mxu0 0.0
    %156 = vmatprep.subr.mxu0 0.0
    %157 = vmatpush1.msra.mxu0 0.0
    %158 = vmatprep.subr.mxu0 0.0
    %159 = vmatpush1.msra.mxu0 0.0
    %160 = vmatprep.subr.mxu0 0.0
    %161 = vmatpush1.msra.mxu0 0.0
    %162 = vmatprep.subr.mxu0 0.0
    %163 = vmatpush1.msra.mxu0 0.0
    %164 = vmatprep.subr.mxu0 0.0
    %165 = vmatpush1.msra.mxu0 0.0
    %166 = vmatprep.subr.mxu0 0.0
    %167 = vmatpush1.msra.mxu0 0.0
    %168 = vmatprep.subr.mxu0 0.0
    %169 = vmatpush1.msra.mxu0 0.0
    %170 = vmatprep.subr.mxu0 0.0
    %171 = vmatpush1.msra.mxu0 0.0
    %172 = vmatprep.subr.mxu0 0.0
    %173 = vmatpush1.msra.mxu0 0.0
    %174 = vmatprep.subr.mxu0 0.0
    %175 = vmatpush1.msra.mxu0 0.0
    %176 = vmatprep.subr.mxu0 0.0
    %177 = vmatpush1.msra.mxu0 0.0
    %178 = vmatprep.mubr.f32.mxu0 0.0
    %179 = vmatmul.mubr.f32.gmra.mrb[0].mxu0 %v87
    %v180 = vpop.f32.mrb[0].mxu0
    %v181 = vadd.f32 %v83, %v180
    %v182 = vpop.f32.mrb[0].mxu0
    %183 = vmatprep.mubr.f32.mxu0 0.0
    %184 = vmatmul.mubr.f32.gmra.mrb[0].mxu0 %v90
    %v185 = vpop.f32.mrb[0].mxu0
    %v186 = vadd.f32 %v83, %v185
    %v187 = vpop.f32.mrb[0].mxu0
    %188 = vmatprep.mubr.f32.mxu0 0.0
    %189 = vmatmul.mubr.f32.gmra.mrb[0].mxu0 %v93
    %v190 = vpop.f32.mrb[0].mxu0
    %v191 = vadd.f32 %v83, %v190
    %v192 = vpop.f32.mrb[0].mxu0
    %193 = vmatprep.mubr.f32.mxu0 0.0
    %194 = vmatmul.mubr.f32.gmra.mrb[0].mxu0 %v96
    %v195 = vpop.f32.mrb[0].mxu0
    %v196 = vadd.f32 %v83, %v195
    %v197 = vpop.f32.mrb[0].mxu0
    %198 = vmatprep.mubr.f32.mxu0 0.0
    %199 = vmatmul.mubr.f32.gmra.mrb[0].mxu0 %v99
    %v200 = vpop.f32.mrb[0].mxu0
    %v201 = vadd.f32 %v83, %v200
    %v202 = vpop.f32.mrb[0].mxu0
    %203 = vmatprep.mubr.f32.mxu0 0.0
    %204 = vmatmul.mubr.f32.gmra.mrb[0].mxu0 %v102
    %v205 = vpop.f32.mrb[0].mxu0
    %v206 = vadd.f32 %v83, %v205
    %v207 = vpop.f32.mrb[0].mxu0
    %208 = vmatprep.mubr.f32.mxu0 0.0
    %209 = vmatmul.mubr.f32.gmra.mrb[0].mxu0 %v105
    %v210 = vpop.f32.mrb[0].mxu0
    %v211 = vadd.f32 %v83, %v210
    %v212 = vpop.f32.mrb[0].mxu0
    %213 = vmatprep.mubr.f32.mxu0 0.0
    %214 = vmatmul.mubr.f32.gmra.mrb[0].mxu0 %v108
    %v215 = vpop.f32.mrb[0].mxu0
    %v216 = vadd.f32 %v83, %v215
    %v217 = vpop.f32.mrb[0].mxu0
    %218 = vdwg.mxu0
    %vm219 = vcmask 261120
    %v221 = vsel %vm219, 0.0, 0
    %223 = vmatprep.subr.mxu0 0.0
    %224 = vmatpush1.msra.mxu0 %v61
    %225 = vmatprep.subr.mxu0 0.0
    %226 = vmatpush1.msra.mxu0 %v62
    %227 = vmatprep.subr.mxu0 0.0
    %228 = vmatpush1.msra.mxu0 %v63
    %229 = vmatprep.subr.mxu0 0.0
    %230 = vmatpush1.msra.mxu0 %v64
    %231 = vmatprep.subr.mxu0 0.0
    %232 = vmatpush1.msra.mxu0 0.0
    %233 = vmatprep.subr.mxu0 0.0
    %234 = vmatpush1.msra.mxu0 0.0
    %235 = vmatprep.subr.mxu0 0.0
    %236 = vmatpush1.msra.mxu0 0.0
    %237 = vmatprep.subr.mxu0 0.0
    %238 = vmatpush1.msra.mxu0 0.0
    %239 = vmatprep.subr.mxu0 0.0
    %240 = vmatpush1.msra.mxu0 0.0
    %241 = vmatprep.subr.mxu0 0.0
    %242 = vmatpush1.msra.mxu0 0.0
    %243 = vmatprep.subr.mxu0 0.0
    %244 = vmatpush1.msra.mxu0 0.0
    %245 = vmatprep.subr.mxu0 0.0
    %246 = vmatpush1.msra.mxu0 0.0
    %247 = vmatprep.subr.mxu0 0.0
    %248 = vmatpush1.msra.mxu0 0.0
    %249 = vmatprep.subr.mxu0 0.0
    %250 = vmatpush1.msra.mxu0 0.0
    %251 = vmatprep.subr.mxu0 0.0
    %252 = vmatpush1.msra.mxu0 0.0
    %253 = vmatprep.subr.mxu0 0.0
    %254 = vmatpush1.msra.mxu0 0.0
    %255 = vmatprep.subr.mxu0 0.0
    %256 = vmatpush1.msra.mxu0 0.0
    %257 = vmatprep.subr.mxu0 0.0
    %258 = vmatpush1.msra.mxu0 0.0
    %259 = vmatprep.subr.mxu0 0.0
    %260 = vmatpush1.msra.mxu0 0.0
    %261 = vmatprep.subr.mxu0 0.0
    %262 = vmatpush1.msra.mxu0 0.0
    %263 = vmatprep.subr.mxu0 0.0
    %264 = vmatpush1.msra.mxu0 0.0
    %265 = vmatprep.subr.mxu0 0.0
    %266 = vmatpush1.msra.mxu0 0.0
    %267 = vmatprep.subr.mxu0 0.0
    %268 = vmatpush1.msra.mxu0 0.0
    %269 = vmatprep.subr.mxu0 0.0
    %270 = vmatpush1.msra.mxu0 0.0
    %271 = vmatprep.subr.mxu0 0.0
    %272 = vmatpush1.msra.mxu0 0.0
    %273 = vmatprep.subr.mxu0 0.0
    %274 = vmatpush1.msra.mxu0 0.0
    %275 = vmatprep.subr.mxu0 0.0
    %276 = vmatpush1.msra.mxu0 0.0
    %277 = vmatprep.subr.mxu0 0.0
    %278 = vmatpush1.msra.mxu0 0.0
    %279 = vmatprep.subr.mxu0 0.0
    %280 = vmatpush1.msra.mxu0 0.0
    %281 = vmatprep.subr.mxu0 0.0
    %282 = vmatpush1.msra.mxu0 0.0
    %283 = vmatprep.subr.mxu0 0.0
    %284 = vmatpush1.msra.mxu0 0.0
    %285 = vmatprep.subr.mxu0 0.0
    %286 = vmatpush1.msra.mxu0 0.0
    %287 = vmatprep.mubr.f32.mxu0 0.0
    %288 = vmatmul.mubr.f32.gmra.mrb[0].mxu0 %v221
    %v289 = vpop.f32.mrb[0].mxu0
    %v290 = vadd.f32 0.0, %v289
    %v291 = vpop.f32.mrb[0].mxu0
    %292 = vdwg.mxu0
    %v293 = vadd.f32 %v181, %v290
    %v294 = vxor.u32 %v293, 2147483648
    %v295 = vmul.f32 %v294, 1.442695
    %v296 = vpow.pop %v295
    %v297 = vadd.f32 %v296, 1.0
    %v298 = vrcp.pop %v297
    %v299 = vmul.f32 1.0, %v298
    %v300 = vmul.f32 %v299, 2.0
    %v301 = vsub.f32 %v300, 1.0
    %v302 = vmul.f32 %v299, 0.0
    %304 = vrot.lane.b32.xlu0 %v301, 64
    %v305 = vpop.permute.xlu0 %304
    %v307 = vmul.f32 %v299, %v305
    %309 = vrot.lane.b32.xlu0 %v307, 32
    %v310 = vpop.permute.xlu0 %309
    %v312 = vadd.f32 %v302, %v310
    %v313 = vtanh.pop %v312
    %315 = vrot.lane.b32.xlu0 %v313, 64
    %v316 = vpop.permute.xlu0 %315
    %v318 = vmul.f32 %v299, %v316
    %319 = vmatprep.subr.mxu0 0.0
    %320 = vmatpush1.msra.mxu0 %v65
    %321 = vmatprep.subr.mxu0 0.0
    %322 = vmatpush1.msra.mxu0 %v66
    %323 = vmatprep.subr.mxu0 0.0
    %324 = vmatpush1.msra.mxu0 %v67
    %325 = vmatprep.subr.mxu0 0.0
    %326 = vmatpush1.msra.mxu0 %v68
    %327 = vmatprep.subr.mxu0 0.0
    %328 = vmatpush1.msra.mxu0 0.0
    %329 = vmatprep.subr.mxu0 0.0
    %330 = vmatpush1.msra.mxu0 0.0
    %331 = vmatprep.subr.mxu0 0.0
    %332 = vmatpush1.msra.mxu0 0.0
    %333 = vmatprep.subr.mxu0 0.0
    %334 = vmatpush1.msra.mxu0 0.0
    %335 = vmatprep.subr.mxu0 0.0
    %336 = vmatpush1.msra.mxu0 0.0
    %337 = vmatprep.subr.mxu0 0.0
    %338 = vmatpush1.msra.mxu0 0.0
    %339 = vmatprep.subr.mxu0 0.0
    %340 = vmatpush1.msra.mxu0 0.0
    %341 = vmatprep.subr.mxu0 0.0
    %342 = vmatpush1.msra.mxu0 0.0
    %343 = vmatprep.subr.mxu0 0.0
    %344 = vmatpush1.msra.mxu0 0.0
    %345 = vmatprep.subr.mxu0 0.0
    %346 = vmatpush1.msra.mxu0 0.0
    %347 = vmatprep.subr.mxu0 0.0
    %348 = vmatpush1.msra.mxu0 0.0
    %349 = vmatprep.subr.mxu0 0.0
    %350 = vmatpush1.msra.mxu0 0.0
    %351 = vmatprep.subr.mxu0 0.0
    %352 = vmatpush1.msra.mxu0 0.0
    %353 = vmatprep.subr.mxu0 0.0
    %354 = vmatpush1.msra.mxu0 0.0
    %355 = vmatprep.subr.mxu0 0.0
    %356 = vmatpush1.msra.mxu0 0.0
    %357 = vmatprep.subr.mxu0 0.0
    %358 = vmatpush1.msra.mxu0 0.0
    %359 = vmatprep.subr.mxu0 0.0
    %360 = vmatpush1.msra.mxu0 0.0
    %361 = vmatprep.subr.mxu0 0.0
    %362 = vmatpush1.msra.mxu0 0.0
    %363 = vmatprep.subr.mxu0 0.0
    %364 = vmatpush1.msra.mxu0 0.0
    %365 = vmatprep.subr.mxu0 0.0
    %366 = vmatpush1.msra.mxu0 0.0
    %367 = vmatprep.subr.mxu0 0.0
    %368 = vmatpush1.msra.mxu0 0.0
    %369 = vmatprep.subr.mxu0 0.0
    %370 = vmatpush1.msra.mxu0 0.0
    %371 = vmatprep.subr.mxu0 0.0
    %372 = vmatpush1.msra.mxu0 0.0
    %373 = vmatprep.subr.mxu0 0.0
    %374 = vmatpush1.msra.mxu0 0.0
    %375 = vmatprep.subr.mxu0 0.0
    %376 = vmatpush1.msra.mxu0 0.0
    %377 = vmatprep.subr.mxu0 0.0
    %378 = vmatpush1.msra.mxu0 0.0
    %379 = vmatprep.subr.mxu0 0.0
    %380 = vmatpush1.msra.mxu0 0.0
    %381 = vmatprep.subr.mxu0 0.0
    %382 = vmatpush1.msra.mxu0 0.0
    %383 = vmatprep.mubr.f32.mxu0 0.0
    %384 = vmatmul.mubr.f32.gmra.mrb[0].mxu0 %v221
    %v385 = vpop.f32.mrb[0].mxu0
    %v386 = vadd.f32 0.0, %v385
    %v387 = vpop.f32.mrb[0].mxu0
    %388 = vdwg.mxu0
    %390 = vrot.lane.b32.xlu0 %v318, 32
    %v391 = vpop.permute.xlu0 %390
    %v392 = vsel %vm219, %v391, 0
    %394 = vmatprep.subr.mxu0 0.0
    %395 = vmatpush1.msra.mxu0 %v57
    %396 = vmatprep.subr.mxu0 0.0
    %397 = vmatpush1.msra.mxu0 %v58
    %398 = vmatprep.subr.mxu0 0.0
    %399 = vmatpush1.msra.mxu0 %v59
    %400 = vmatprep.subr.mxu0 0.0
    %401 = vmatpush1.msra.mxu0 %v60
    %402 = vmatprep.subr.mxu0 0.0
    %403 = vmatpush1.msra.mxu0 0.0
    %404 = vmatprep.subr.mxu0 0.0
    %405 = vmatpush1.msra.mxu0 0.0
    %406 = vmatprep.subr.mxu0 0.0
    %407 = vmatpush1.msra.mxu0 0.0
    %408 = vmatprep.subr.mxu0 0.0
    %409 = vmatpush1.msra.mxu0 0.0
    %410 = vmatprep.subr.mxu0 0.0
    %411 = vmatpush1.msra.mxu0 0.0
    %412 = vmatprep.subr.mxu0 0.0
    %413 = vmatpush1.msra.mxu0 0.0
    %414 = vmatprep.subr.mxu0 0.0
    %415 = vmatpush1.msra.mxu0 0.0
    %416 = vmatprep.subr.mxu0 0.0
    %417 = vmatpush1.msra.mxu0 0.0
    %418 = vmatprep.subr.mxu0 0.0
    %419 = vmatpush1.msra.mxu0 0.0
    %420 = vmatprep.subr.mxu0 0.0
    %421 = vmatpush1.msra.mxu0 0.0
    %422 = vmatprep.subr.mxu0 0.0
    %423 = vmatpush1.msra.mxu0 0.0
    %424 = vmatprep.subr.mxu0 0.0
    %425 = vmatpush1.msra.mxu0 0.0
    %426 = vmatprep.subr.mxu0 0.0
    %427 = vmatpush1.msra.mxu0 0.0
    %428 = vmatprep.subr.mxu0 0.0
    %429 = vmatpush1.msra.mxu0 0.0
    %430 = vmatprep.subr.mxu0 0.0
    %431 = vmatpush1.msra.mxu0 0.0
    %432 = vmatprep.subr.mxu0 0.0
    %433 = vmatpush1.msra.mxu0 0.0
    %434 = vmatprep.subr.mxu0 0.0
    %435 = vmatpush1.msra.mxu0 0.0
    %436 = vmatprep.subr.mxu0 0.0
    %437 = vmatpush1.msra.mxu0 0.0
    %438 = vmatprep.subr.mxu0 0.0
    %439 = vmatpush1.msra.mxu0 0.0
    %440 = vmatprep.subr.mxu0 0.0
    %441 = vmatpush1.msra.mxu0 0.0
    %442 = vmatprep.subr.mxu0 0.0
    %443 = vmatpush1.msra.mxu0 0.0
    %444 = vmatprep.subr.mxu0 0.0
    %445 = vmatpush1.msra.mxu0 0.0
    %446 = vmatprep.subr.mxu0 0.0
    %447 = vmatpush1.msra.mxu0 0.0
    %448 = vmatprep.subr.mxu0 0.0
    %449 = vmatpush1.msra.mxu0 0.0
    %450 = vmatprep.subr.mxu0 0.0
    %451 = vmatpush1.msra.mxu0 0.0
    %452 = vmatprep.subr.mxu0 0.0
    %453 = vmatpush1.msra.mxu0 0.0
    %454 = vmatprep.subr.mxu0 0.0
    %455 = vmatpush1.msra.mxu0 0.0
    %456 = vmatprep.subr.mxu0 0.0
    %457 = vmatpush1.msra.mxu0 0.0
    %458 = vmatprep.mubr.f32.mxu0 0.0
    %459 = vmatmul.mubr.f32.gmra.mrb[0].mxu0 %v392
    %v460 = vpop.f32.mrb[0].mxu0
    %v461 = vadd.f32 %v386, %v460
    %v462 = vpop.f32.mrb[0].mxu0
    %463 = vdwg.mxu0
    %v465 = vlaneseq
    %v466 = vshrl.u32 %v465, 7
    %v467 = vsub.s32 0, %v466
    %v468 = vrot.slane %v70, %v467
    %v470 = vadd.f32 %v461, %v468
    %v471 = vxor.u32 %v470, 2147483648
    %v472 = vmul.f32 %v471, 1.442695
    %v473 = vpow.pop %v472
    %v474 = vadd.f32 %v473, 1.0
    %v475 = vrcp.pop %v474
    %v476 = vmul.f32 1.0, %v475
    %v477 = vmul.f32 %v476, 2.0
    %v478 = vsub.f32 %v477, 1.0
    %v479 = vmul.f32 %v476, 0.0
    %481 = vrot.lane.b32.xlu0 %v478, 64
    %v482 = vpop.permute.xlu0 %481
    %v484 = vmul.f32 %v476, %v482
    %486 = vrot.lane.b32.xlu0 %v484, 32
    %v487 = vpop.permute.xlu0 %486
    %v489 = vadd.f32 %v479, %v487
    %v490 = vtanh.pop %v489
    %492 = vrot.lane.b32.xlu0 %v490, 64
    %v493 = vpop.permute.xlu0 %492
    %v495 = vmul.f32 %v476, %v493
    %496 = vmatprep.subr.mxu0 0.0
    %497 = vmatpush1.msra.mxu0 %v61
    %498 = vmatprep.subr.mxu0 0.0
    %499 = vmatpush1.msra.mxu0 %v62
    %500 = vmatprep.subr.mxu0 0.0
    %501 = vmatpush1.msra.mxu0 %v63
    %502 = vmatprep.subr.mxu0 0.0
    %503 = vmatpush1.msra.mxu0 %v64
    %504 = vmatprep.subr.mxu0 0.0
    %505 = vmatpush1.msra.mxu0 0.0
    %506 = vmatprep.subr.mxu0 0.0
    %507 = vmatpush1.msra.mxu0 0.0
    %508 = vmatprep.subr.mxu0 0.0
    %509 = vmatpush1.msra.mxu0 0.0
    %510 = vmatprep.subr.mxu0 0.0
    %511 = vmatpush1.msra.mxu0 0.0
    %512 = vmatprep.subr.mxu0 0.0
    %513 = vmatpush1.msra.mxu0 0.0
    %514 = vmatprep.subr.mxu0 0.0
    %515 = vmatpush1.msra.mxu0 0.0
    %516 = vmatprep.subr.mxu0 0.0
    %517 = vmatpush1.msra.mxu0 0.0
    %518 = vmatprep.subr.mxu0 0.0
    %519 = vmatpush1.msra.mxu0 0.0
    %520 = vmatprep.subr.mxu0 0.0
    %521 = vmatpush1.msra.mxu0 0.0
    %522 = vmatprep.subr.mxu0 0.0
    %523 = vmatpush1.msra.mxu0 0.0
    %524 = vmatprep.subr.mxu0 0.0
    %525 = vmatpush1.msra.mxu0 0.0
    %526 = vmatprep.subr.mxu0 0.0
    %527 = vmatpush1.msra.mxu0 0.0
    %528 = vmatprep.subr.mxu0 0.0
    %529 = vmatpush1.msra.mxu0 0.0
    %530 = vmatprep.subr.mxu0 0.0
    %531 = vmatpush1.msra.mxu0 0.0
    %532 = vmatprep.subr.mxu0 0.0
    %533 = vmatpush1.msra.mxu0 0.0
    %534 = vmatprep.subr.mxu0 0.0
    %535 = vmatpush1.msra.mxu0 0.0
    %536 = vmatprep.subr.mxu0 0.0
    %537 = vmatpush1.msra.mxu0 0.0
    %538 = vmatprep.subr.mxu0 0.0
    %539 = vmatpush1.msra.mxu0 0.0
    %540 = vmatprep.subr.mxu0 0.0
    %541 = vmatpush1.msra.mxu0 0.0
    %542 = vmatprep.subr.mxu0 0.0
    %543 = vmatpush1.msra.mxu0 0.0
    %544 = vmatprep.subr.mxu0 0.0
    %545 = vmatpush1.msra.mxu0 0.0
    %546 = vmatprep.subr.mxu0 0.0
    %547 = vmatpush1.msra.mxu0 0.0
    %548 = vmatprep.subr.mxu0 0.0
    %549 = vmatpush1.msra.mxu0 0.0
    %550 = vmatprep.subr.mxu0 0.0
    %551 = vmatpush1.msra.mxu0 0.0
    %552 = vmatprep.subr.mxu0 0.0
    %553 = vmatpush1.msra.mxu0 0.0
    %554 = vmatprep.subr.mxu0 0.0
    %555 = vmatpush1.msra.mxu0 0.0
    %556 = vmatprep.subr.mxu0 0.0
    %557 = vmatpush1.msra.mxu0 0.0
    %558 = vmatprep.subr.mxu0 0.0
    %559 = vmatpush1.msra.mxu0 0.0
    %560 = vmatprep.mubr.f32.mxu0 0.0
    %561 = vmatmul.mubr.f32.gmra.mrb[0].mxu0 %v392
    %v562 = vpop.f32.mrb[0].mxu0
    %v563 = vadd.f32 0.0, %v562
    %v564 = vpop.f32.mrb[0].mxu0
    %565 = vdwg.mxu0
    %v566 = vadd.f32 %v186, %v563
    %v567 = vxor.u32 %v566, 2147483648
    %v568 = vmul.f32 %v567, 1.442695
    %v569 = vpow.pop %v568
    %v570 = vadd.f32 %v569, 1.0
    %v571 = vrcp.pop %v570
    %v572 = vmul.f32 1.0, %v571
    %v573 = vmul.f32 %v572, 2.0
    %v574 = vsub.f32 %v573, 1.0
    %v575 = vmul.f32 %v572, %v312
    %577 = vrot.lane.b32.xlu0 %v574, 64
    %v578 = vpop.permute.xlu0 %577
    %v580 = vmul.f32 %v572, %v578
    %582 = vrot.lane.b32.xlu0 %v580, 32
    %v583 = vpop.permute.xlu0 %582
    %v585 = vadd.f32 %v575, %v583
    %v586 = vtanh.pop %v585
    %588 = vrot.lane.b32.xlu0 %v586, 64
    %v589 = vpop.permute.xlu0 %588
    %v591 = vmul.f32 %v572, %v589
    %593 = vrot.lane.b32.xlu0 %v495, 32
    %v594 = vpop.permute.xlu0 %593
    %v595 = vsel %vm219, %v594, 0
    %597 = vmatprep.subr.mxu0 0.0
    %598 = vmatpush1.msra.mxu0 %v65
    %599 = vmatprep.subr.mxu0 0.0
    %600 = vmatpush1.msra.mxu0 %v66
    %601 = vmatprep.subr.mxu0 0.0
    %602 = vmatpush1.msra.mxu0 %v67
    %603 = vmatprep.subr.mxu0 0.0
    %604 = vmatpush1.msra.mxu0 %v68
    %605 = vmatprep.subr.mxu0 0.0
    %606 = vmatpush1.msra.mxu0 0.0
    %607 = vmatprep.subr.mxu0 0.0
    %608 = vmatpush1.msra.mxu0 0.0
    %609 = vmatprep.subr.mxu0 0.0
    %610 = vmatpush1.msra.mxu0 0.0
    %611 = vmatprep.subr.mxu0 0.0
    %612 = vmatpush1.msra.mxu0 0.0
    %613 = vmatprep.subr.mxu0 0.0
    %614 = vmatpush1.msra.mxu0 0.0
    %615 = vmatprep.subr.mxu0 0.0
    %616 = vmatpush1.msra.mxu0 0.0
    %617 = vmatprep.subr.mxu0 0.0
    %618 = vmatpush1.msra.mxu0 0.0
    %619 = vmatprep.subr.mxu0 0.0
    %620 = vmatpush1.msra.mxu0 0.0
    %621 = vmatprep.subr.mxu0 0.0
    %622 = vmatpush1.msra.mxu0 0.0
    %623 = vmatprep.subr.mxu0 0.0
    %624 = vmatpush1.msra.mxu0 0.0
    %625 = vmatprep.subr.mxu0 0.0
    %626 = vmatpush1.msra.mxu0 0.0
    %627 = vmatprep.subr.mxu0 0.0
    %628 = vmatpush1.msra.mxu0 0.0
    %629 = vmatprep.subr.mxu0 0.0
    %630 = vmatpush1.msra.mxu0 0.0
    %631 = vmatprep.subr.mxu0 0.0
    %632 = vmatpush1.msra.mxu0 0.0
    %633 = vmatprep.subr.mxu0 0.0
    %634 = vmatpush1.msra.mxu0 0.0
    %635 = vmatprep.subr.mxu0 0.0
    %636 = vmatpush1.msra.mxu0 0.0
    %637 = vmatprep.subr.mxu0 0.0
    %638 = vmatpush1.msra.mxu0 0.0
    %639 = vmatprep.subr.mxu0 0.0
    %640 = vmatpush1.msra.mxu0 0.0
    %641 = vmatprep.subr.mxu0 0.0
    %642 = vmatpush1.msra.mxu0 0.0
    %643 = vmatprep.subr.mxu0 0.0
    %644 = vmatpush1.msra.mxu0 0.0
    %645 = vmatprep.subr.mxu0 0.0
    %646 = vmatpush1.msra.mxu0 0.0
    %647 = vmatprep.subr.mxu0 0.0
    %648 = vmatpush1.msra.mxu0 0.0
    %649 = vmatprep.subr.mxu0 0.0
    %650 = vmatpush1.msra.mxu0 0.0
    %651 = vmatprep.subr.mxu0 0.0
    %652 = vmatpush1.msra.mxu0 0.0
    %653 = vmatprep.subr.mxu0 0.0
    %654 = vmatpush1.msra.mxu0 0.0
    %655 = vmatprep.subr.mxu0 0.0
    %656 = vmatpush1.msra.mxu0 0.0
    %657 = vmatprep.subr.mxu0 0.0
    %658 = vmatpush1.msra.mxu0 0.0
    %659 = vmatprep.subr.mxu0 0.0
    %660 = vmatpush1.msra.mxu0 0.0
    %661 = vmatprep.mubr.f32.mxu0 0.0
    %662 = vmatmul.mubr.f32.gmra.mrb[0].mxu0 %v595
    %v663 = vpop.f32.mrb[0].mxu0
    %v664 = vadd.f32 0.0, %v663
    %v665 = vpop.f32.mrb[0].mxu0
    %666 = vdwg.mxu0
    %668 = vrot.lane.b32.xlu0 %v591, 32
    %v669 = vpop.permute.xlu0 %668
    %v670 = vsel %vm219, %v669, 0
    %672 = vmatprep.subr.mxu0 0.0
    %673 = vmatpush1.msra.mxu0 %v57
    %674 = vmatprep.subr.mxu0 0.0
    %675 = vmatpush1.msra.mxu0 %v58
    %676 = vmatprep.subr.mxu0 0.0
    %677 = vmatpush1.msra.mxu0 %v59
    %678 = vmatprep.subr.mxu0 0.0
    %679 = vmatpush1.msra.mxu0 %v60
    %680 = vmatprep.subr.mxu0 0.0
    %681 = vmatpush1.msra.mxu0 0.0
    %682 = vmatprep.subr.mxu0 0.0
    %683 = vmatpush1.msra.mxu0 0.0
    %684 = vmatprep.subr.mxu0 0.0
    %685 = vmatpush1.msra.mxu0 0.0
    %686 = vmatprep.subr.mxu0 0.0
    %687 = vmatpush1.msra.mxu0 0.0
    %688 = vmatprep.subr.mxu0 0.0
    %689 = vmatpush1.msra.mxu0 0.0
    %690 = vmatprep.subr.mxu0 0.0
    %691 = vmatpush1.msra.mxu0 0.0
    %692 = vmatprep.subr.mxu0 0.0
    %693 = vmatpush1.msra.mxu0 0.0
    %694 = vmatprep.subr.mxu0 0.0
    %695 = vmatpush1.msra.mxu0 0.0
    %696 = vmatprep.subr.mxu0 0.0
    %697 = vmatpush1.msra.mxu0 0.0
    %698 = vmatprep.subr.mxu0 0.0
    %699 = vmatpush1.msra.mxu0 0.0
    %700 = vmatprep.subr.mxu0 0.0
    %701 = vmatpush1.msra.mxu0 0.0
    %702 = vmatprep.subr.mxu0 0.0
    %703 = vmatpush1.msra.mxu0 0.0
    %704 = vmatprep.subr.mxu0 0.0
    %705 = vmatpush1.msra.mxu0 0.0
    %706 = vmatprep.subr.mxu0 0.0
    %707 = vmatpush1.msra.mxu0 0.0
    %708 = vmatprep.subr.mxu0 0.0
    %709 = vmatpush1.msra.mxu0 0.0
    %710 = vmatprep.subr.mxu0 0.0
    %711 = vmatpush1.msra.mxu0 0.0
    %712 = vmatprep.subr.mxu0 0.0
    %713 = vmatpush1.msra.mxu0 0.0
    %714 = vmatprep.subr.mxu0 0.0
    %715 = vmatpush1.msra.mxu0 0.0
    %716 = vmatprep.subr.mxu0 0.0
    %717 = vmatpush1.msra.mxu0 0.0
    %718 = vmatprep.subr.mxu0 0.0
    %719 = vmatpush1.msra.mxu0 0.0
    %720 = vmatprep.subr.mxu0 0.0
    %721 = vmatpush1.msra.mxu0 0.0
    %722 = vmatprep.subr.mxu0 0.0
    %723 = vmatpush1.msra.mxu0 0.0
    %724 = vmatprep.subr.mxu0 0.0
    %725 = vmatpush1.msra.mxu0 0.0
    %726 = vmatprep.subr.mxu0 0.0
    %727 = vmatpush1.msra.mxu0 0.0
    %728 = vmatprep.subr.mxu0 0.0
    %729 = vmatpush1.msra.mxu0 0.0
    %730 = vmatprep.subr.mxu0 0.0
    %731 = vmatpush1.msra.mxu0 0.0
    %732 = vmatprep.subr.mxu0 0.0
    %733 = vmatpush1.msra.mxu0 0.0
    %734 = vmatprep.subr.mxu0 0.0
    %735 = vmatpush1.msra.mxu0 0.0
    %736 = vmatprep.mubr.f32.mxu0 0.0
    %737 = vmatmul.mubr.f32.gmra.mrb[0].mxu0 %v670
    %v738 = vpop.f32.mrb[0].mxu0
    %v739 = vadd.f32 %v664, %v738
    %v740 = vpop.f32.mrb[0].mxu0
    %741 = vdwg.mxu0
    %v742 = vadd.f32 %v739, %v468
    %v743 = vxor.u32 %v742, 2147483648
    %v744 = vmul.f32 %v743, 1.442695
    %v745 = vpow.pop %v744
    %v746 = vadd.f32 %v745, 1.0
    %v747 = vrcp.pop %v746
    %v748 = vmul.f32 1.0, %v747
    %v749 = vmul.f32 %v748, 2.0
    %v750 = vsub.f32 %v749, 1.0
    %v751 = vmul.f32 %v748, %v489
    %753 = vrot.lane.b32.xlu0 %v750, 64
    %v754 = vpop.permute.xlu0 %753
    %v756 = vmul.f32 %v748, %v754
    %758 = vrot.lane.b32.xlu0 %v756, 32
    %v759 = vpop.permute.xlu0 %758
    %v761 = vadd.f32 %v751, %v759
    %v762 = vtanh.pop %v761
    %764 = vrot.lane.b32.xlu0 %v762, 64
    %v765 = vpop.permute.xlu0 %764
    %v767 = vmul.f32 %v748, %v765
    %768 = vmatprep.subr.mxu0 0.0
    %769 = vmatpush1.msra.mxu0 %v61
    %770 = vmatprep.subr.mxu0 0.0
    %771 = vmatpush1.msra.mxu0 %v62
    %772 = vmatprep.subr.mxu0 0.0
    %773 = vmatpush1.msra.mxu0 %v63
    %774 = vmatprep.subr.mxu0 0.0
    %775 = vmatpush1.msra.mxu0 %v64
    %776 = vmatprep.subr.mxu0 0.0
    %777 = vmatpush1.msra.mxu0 0.0
    %778 = vmatprep.subr.mxu0 0.0
    %779 = vmatpush1.msra.mxu0 0.0
    %780 = vmatprep.subr.mxu0 0.0
    %781 = vmatpush1.msra.mxu0 0.0
    %782 = vmatprep.subr.mxu0 0.0
    %783 = vmatpush1.msra.mxu0 0.0
    %784 = vmatprep.subr.mxu0 0.0
    %785 = vmatpush1.msra.mxu0 0.0
    %786 = vmatprep.subr.mxu0 0.0
    %787 = vmatpush1.msra.mxu0 0.0
    %788 = vmatprep.subr.mxu0 0.0
    %789 = vmatpush1.msra.mxu0 0.0
    %790 = vmatprep.subr.mxu0 0.0
    %791 = vmatpush1.msra.mxu0 0.0
    %792 = vmatprep.subr.mxu0 0.0
    %793 = vmatpush1.msra.mxu0 0.0
    %794 = vmatprep.subr.mxu0 0.0
    %795 = vmatpush1.msra.mxu0 0.0
    %796 = vmatprep.subr.mxu0 0.0
    %797 = vmatpush1.msra.mxu0 0.0
    %798 = vmatprep.subr.mxu0 0.0
    %799 = vmatpush1.msra.mxu0 0.0
    %800 = vmatprep.subr.mxu0 0.0
    %801 = vmatpush1.msra.mxu0 0.0
    %802 = vmatprep.subr.mxu0 0.0
    %803 = vmatpush1.msra.mxu0 0.0
    %804 = vmatprep.subr.mxu0 0.0
    %805 = vmatpush1.msra.mxu0 0.0
    %806 = vmatprep.subr.mxu0 0.0
    %807 = vmatpush1.msra.mxu0 0.0
    %808 = vmatprep.subr.mxu0 0.0
    %809 = vmatpush1.msra.mxu0 0.0
    %810 = vmatprep.subr.mxu0 0.0
    %811 = vmatpush1.msra.mxu0 0.0
    %812 = vmatprep.subr.mxu0 0.0
    %813 = vmatpush1.msra.mxu0 0.0
    %814 = vmatprep.subr.mxu0 0.0
    %815 = vmatpush1.msra.mxu0 0.0
    %816 = vmatprep.subr.mxu0 0.0
    %817 = vmatpush1.msra.mxu0 0.0
    %818 = vmatprep.subr.mxu0 0.0
    %819 = vmatpush1.msra.mxu0 0.0
    %820 = vmatprep.subr.mxu0 0.0
    %821 = vmatpush1.msra.mxu0 0.0
    %822 = vmatprep.subr.mxu0 0.0
    %823 = vmatpush1.msra.mxu0 0.0
    %824 = vmatprep.subr.mxu0 0.0
    %825 = vmatpush1.msra.mxu0 0.0
    %826 = vmatprep.subr.mxu0 0.0
    %827 = vmatpush1.msra.mxu0 0.0
    %828 = vmatprep.subr.mxu0 0.0
    %829 = vmatpush1.msra.mxu0 0.0
    %830 = vmatprep.subr.mxu0 0.0
    %831 = vmatpush1.msra.mxu0 0.0
    %832 = vmatprep.mubr.f32.mxu0 0.0
    %833 = vmatmul.mubr.f32.gmra.mrb[0].mxu0 %v670
    %v834 = vpop.f32.mrb[0].mxu0
    %v835 = vadd.f32 0.0, %v834
    %v836 = vpop.f32.mrb[0].mxu0
    %837 = vdwg.mxu0
    %v838 = vadd.f32 %v191, %v835
    %v839 = vxor.u32 %v838, 2147483648
    %v840 = vmul.f32 %v839, 1.442695
    %v841 = vpow.pop %v840
    %v842 = vadd.f32 %v841, 1.0
    %v843 = vrcp.pop %v842
    %v844 = vmul.f32 1.0, %v843
    %v845 = vmul.f32 %v844, 2.0
    %v846 = vsub.f32 %v845, 1.0
    %v847 = vmul.f32 %v844, %v585
    %849 = vrot.lane.b32.xlu0 %v846, 64
    %v850 = vpop.permute.xlu0 %849
    %v852 = vmul.f32 %v844, %v850
    %854 = vrot.lane.b32.xlu0 %v852, 32
    %v855 = vpop.permute.xlu0 %854
    %v857 = vadd.f32 %v847, %v855
    %v858 = vtanh.pop %v857
    %860 = vrot.lane.b32.xlu0 %v858, 64
    %v861 = vpop.permute.xlu0 %860
    %v863 = vmul.f32 %v844, %v861
    %865 = vrot.lane.b32.xlu0 %v767, 32
    %v866 = vpop.permute.xlu0 %865
    %v867 = vsel %vm219, %v866, 0
    %869 = vmatprep.subr.mxu0 0.0
    %870 = vmatpush1.msra.mxu0 %v65
    %871 = vmatprep.subr.mxu0 0.0
    %872 = vmatpush1.msra.mxu0 %v66
    %873 = vmatprep.subr.mxu0 0.0
    %874 = vmatpush1.msra.mxu0 %v67
    %875 = vmatprep.subr.mxu0 0.0
    %876 = vmatpush1.msra.mxu0 %v68
    %877 = vmatprep.subr.mxu0 0.0
    %878 = vmatpush1.msra.mxu0 0.0
    %879 = vmatprep.subr.mxu0 0.0
    %880 = vmatpush1.msra.mxu0 0.0
    %881 = vmatprep.subr.mxu0 0.0
    %882 = vmatpush1.msra.mxu0 0.0
    %883 = vmatprep.subr.mxu0 0.0
    %884 = vmatpush1.msra.mxu0 0.0
    %885 = vmatprep.subr.mxu0 0.0
    %886 = vmatpush1.msra.mxu0 0.0
    %887 = vmatprep.subr.mxu0 0.0
    %888 = vmatpush1.msra.mxu0 0.0
    %889 = vmatprep.subr.mxu0 0.0
    %890 = vmatpush1.msra.mxu0 0.0
    %891 = vmatprep.subr.mxu0 0.0
    %892 = vmatpush1.msra.mxu0 0.0
    %893 = vmatprep.subr.mxu0 0.0
    %894 = vmatpush1.msra.mxu0 0.0
    %895 = vmatprep.subr.mxu0 0.0
    %896 = vmatpush1.msra.mxu0 0.0
    %897 = vmatprep.subr.mxu0 0.0
    %898 = vmatpush1.msra.mxu0 0.0
    %899 = vmatprep.subr.mxu0 0.0
    %900 = vmatpush1.msra.mxu0 0.0
    %901 = vmatprep.subr.mxu0 0.0
    %902 = vmatpush1.msra.mxu0 0.0
    %903 = vmatprep.subr.mxu0 0.0
    %904 = vmatpush1.msra.mxu0 0.0
    %905 = vmatprep.subr.mxu0 0.0
    %906 = vmatpush1.msra.mxu0 0.0
    %907 = vmatprep.subr.mxu0 0.0
    %908 = vmatpush1.msra.mxu0 0.0
    %909 = vmatprep.subr.mxu0 0.0
    %910 = vmatpush1.msra.mxu0 0.0
    %911 = vmatprep.subr.mxu0 0.0
    %912 = vmatpush1.msra.mxu0 0.0
    %913 = vmatprep.subr.mxu0 0.0
    %914 = vmatpush1.msra.mxu0 0.0
    %915 = vmatprep.subr.mxu0 0.0
    %916 = vmatpush1.msra.mxu0 0.0
    %917 = vmatprep.subr.mxu0 0.0
    %918 = vmatpush1.msra.mxu0 0.0
    %919 = vmatprep.subr.mxu0 0.0
    %920 = vmatpush1.msra.mxu0 0.0
    %921 = vmatprep.subr.mxu0 0.0
    %922 = vmatpush1.msra.mxu0 0.0
    %923 = vmatprep.subr.mxu0 0.0
    %924 = vmatpush1.msra.mxu0 0.0
    %925 = vmatprep.subr.mxu0 0.0
    %926 = vmatpush1.msra.mxu0 0.0
    %927 = vmatprep.subr.mxu0 0.0
    %928 = vmatpush1.msra.mxu0 0.0
    %929 = vmatprep.subr.mxu0 0.0
    %930 = vmatpush1.msra.mxu0 0.0
    %931 = vmatprep.subr.mxu0 0.0
    %932 = vmatpush1.msra.mxu0 0.0
    %933 = vmatprep.mubr.f32.mxu0 0.0
    %934 = vmatmul.mubr.f32.gmra.mrb[0].mxu0 %v867
    %v935 = vpop.f32.mrb[0].mxu0
    %v936 = vadd.f32 0.0, %v935
    %v937 = vpop.f32.mrb[0].mxu0
    %938 = vdwg.mxu0
    %940 = vrot.lane.b32.xlu0 %v863, 32
    %v941 = vpop.permute.xlu0 %940
    %v942 = vsel %vm219, %v941, 0
    %944 = vmatprep.subr.mxu0 0.0
    %945 = vmatpush1.msra.mxu0 %v57
    %946 = vmatprep.subr.mxu0 0.0
    %947 = vmatpush1.msra.mxu0 %v58
    %948 = vmatprep.subr.mxu0 0.0
    %949 = vmatpush1.msra.mxu0 %v59
    %950 = vmatprep.subr.mxu0 0.0
    %951 = vmatpush1.msra.mxu0 %v60
    %952 = vmatprep.subr.mxu0 0.0
    %953 = vmatpush1.msra.mxu0 0.0
    %954 = vmatprep.subr.mxu0 0.0
    %955 = vmatpush1.msra.mxu0 0.0
    %956 = vmatprep.subr.mxu0 0.0
    %957 = vmatpush1.msra.mxu0 0.0
    %958 = vmatprep.subr.mxu0 0.0
    %959 = vmatpush1.msra.mxu0 0.0
    %960 = vmatprep.subr.mxu0 0.0
    %961 = vmatpush1.msra.mxu0 0.0
    %962 = vmatprep.subr.mxu0 0.0
    %963 = vmatpush1.msra.mxu0 0.0
    %964 = vmatprep.subr.mxu0 0.0
    %965 = vmatpush1.msra.mxu0 0.0
    %966 = vmatprep.subr.mxu0 0.0
    %967 = vmatpush1.msra.mxu0 0.0
    %968 = vmatprep.subr.mxu0 0.0
    %969 = vmatpush1.msra.mxu0 0.0
    %970 = vmatprep.subr.mxu0 0.0
    %971 = vmatpush1.msra.mxu0 0.0
    %972 = vmatprep.subr.mxu0 0.0
    %973 = vmatpush1.msra.mxu0 0.0
    %974 = vmatprep.subr.mxu0 0.0
    %975 = vmatpush1.msra.mxu0 0.0
    %976 = vmatprep.subr.mxu0 0.0
    %977 = vmatpush1.msra.mxu0 0.0
    %978 = vmatprep.subr.mxu0 0.0
    %979 = vmatpush1.msra.mxu0 0.0
    %980 = vmatprep.subr.mxu0 0.0
    %981 = vmatpush1.msra.mxu0 0.0
    %982 = vmatprep.subr.mxu0 0.0
    %983 = vmatpush1.msra.mxu0 0.0
    %984 = vmatprep.subr.mxu0 0.0
    %985 = vmatpush1.msra.mxu0 0.0
    %986 = vmatprep.subr.mxu0 0.0
    %987 = vmatpush1.msra.mxu0 0.0
    %988 = vmatprep.subr.mxu0 0.0
    %989 = vmatpush1.msra.mxu0 0.0
    %990 = vmatprep.subr.mxu0 0.0
    %991 = vmatpush1.msra.mxu0 0.0
    %992 = vmatprep.subr.mxu0 0.0
    %993 = vmatpush1.msra.mxu0 0.0
    %994 = vmatprep.subr.mxu0 0.0
    %995 = vmatpush1.msra.mxu0 0.0
    %996 = vmatprep.subr.mxu0 0.0
    %997 = vmatpush1.msra.mxu0 0.0
    %998 = vmatprep.subr.mxu0 0.0
    %999 = vmatpush1.msra.mxu0 0.0
    %1000 = vmatprep.subr.mxu0 0.0
    %1001 = vmatpush1.msra.mxu0 0.0
    %1002 = vmatprep.subr.mxu0 0.0
    %1003 = vmatpush1.msra.mxu0 0.0
    %1004 = vmatprep.subr.mxu0 0.0
    %1005 = vmatpush1.msra.mxu0 0.0
    %1006 = vmatprep.subr.mxu0 0.0
    %1007 = vmatpush1.msra.mxu0 0.0
    %1008 = vmatprep.mubr.f32.mxu0 0.0
    %1009 = vmatmul.mubr.f32.gmra.mrb[0].mxu0 %v942
    %v1010 = vpop.f32.mrb[0].mxu0
    %v1011 = vadd.f32 %v936, %v1010
    %v1012 = vpop.f32.mrb[0].mxu0
    %1013 = vdwg.mxu0
    %v1014 = vadd.f32 %v1011, %v468
    %v1015 = vxor.u32 %v1014, 2147483648
    %v1016 = vmul.f32 %v1015, 1.442695
    %v1017 = vpow.pop %v1016
    %v1018 = vadd.f32 %v1017, 1.0
    %v1019 = vrcp.pop %v1018
    %v1020 = vmul.f32 1.0, %v1019
    %v1021 = vmul.f32 %v1020, 2.0
    %v1022 = vsub.f32 %v1021, 1.0
    %v1023 = vmul.f32 %v1020, %v761
    %1025 = vrot.lane.b32.xlu0 %v1022, 64
    %v1026 = vpop.permute.xlu0 %1025
    %v1028 = vmul.f32 %v1020, %v1026
    %1030 = vrot.lane.b32.xlu0 %v1028, 32
    %v1031 = vpop.permute.xlu0 %1030
    %v1033 = vadd.f32 %v1023, %v1031
    %v1034 = vtanh.pop %v1033
    %1036 = vrot.lane.b32.xlu0 %v1034, 64
    %v1037 = vpop.permute.xlu0 %1036
    %v1039 = vmul.f32 %v1020, %v1037
    %1040 = vmatprep.subr.mxu0 0.0
    %1041 = vmatpush1.msra.mxu0 %v61
    %1042 = vmatprep.subr.mxu0 0.0
    %1043 = vmatpush1.msra.mxu0 %v62
    %1044 = vmatprep.subr.mxu0 0.0
    %1045 = vmatpush1.msra.mxu0 %v63
    %1046 = vmatprep.subr.mxu0 0.0
    %1047 = vmatpush1.msra.mxu0 %v64
    %1048 = vmatprep.subr.mxu0 0.0
    %1049 = vmatpush1.msra.mxu0 0.0
    %1050 = vmatprep.subr.mxu0 0.0
    %1051 = vmatpush1.msra.mxu0 0.0
    %1052 = vmatprep.subr.mxu0 0.0
    %1053 = vmatpush1.msra.mxu0 0.0
    %1054 = vmatprep.subr.mxu0 0.0
    %1055 = vmatpush1.msra.mxu0 0.0
    %1056 = vmatprep.subr.mxu0 0.0
    %1057 = vmatpush1.msra.mxu0 0.0
    %1058 = vmatprep.subr.mxu0 0.0
    %1059 = vmatpush1.msra.mxu0 0.0
    %1060 = vmatprep.subr.mxu0 0.0
    %1061 = vmatpush1.msra.mxu0 0.0
    %1062 = vmatprep.subr.mxu0 0.0
    %1063 = vmatpush1.msra.mxu0 0.0
    %1064 = vmatprep.subr.mxu0 0.0
    %1065 = vmatpush1.msra.mxu0 0.0
    %1066 = vmatprep.subr.mxu0 0.0
    %1067 = vmatpush1.msra.mxu0 0.0
    %1068 = vmatprep.subr.mxu0 0.0
    %1069 = vmatpush1.msra.mxu0 0.0
    %1070 = vmatprep.subr.mxu0 0.0
    %1071 = vmatpush1.msra.mxu0 0.0
    %1072 = vmatprep.subr.mxu0 0.0
    %1073 = vmatpush1.msra.mxu0 0.0
    %1074 = vmatprep.subr.mxu0 0.0
    %1075 = vmatpush1.msra.mxu0 0.0
    %1076 = vmatprep.subr.mxu0 0.0
    %1077 = vmatpush1.msra.mxu0 0.0
    %1078 = vmatprep.subr.mxu0 0.0
    %1079 = vmatpush1.msra.mxu0 0.0
    %1080 = vmatprep.subr.mxu0 0.0
    %1081 = vmatpush1.msra.mxu0 0.0
    %1082 = vmatprep.subr.mxu0 0.0
    %1083 = vmatpush1.msra.mxu0 0.0
    %1084 = vmatprep.subr.mxu0 0.0
    %1085 = vmatpush1.msra.mxu0 0.0
    %1086 = vmatprep.subr.mxu0 0.0
    %1087 = vmatpush1.msra.mxu0 0.0
    %1088 = vmatprep.subr.mxu0 0.0
    %1089 = vmatpush1.msra.mxu0 0.0
    %1090 = vmatprep.subr.mxu0 0.0
    %1091 = vmatpush1.msra.mxu0 0.0
    %1092 = vmatprep.subr.mxu0 0.0
    %1093 = vmatpush1.msra.mxu0 0.0
    %1094 = vmatprep.subr.mxu0 0.0
    %1095 = vmatpush1.msra.mxu0 0.0
    %1096 = vmatprep.subr.mxu0 0.0
    %1097 = vmatpush1.msra.mxu0 0.0
    %1098 = vmatprep.subr.mxu0 0.0
    %1099 = vmatpush1.msra.mxu0 0.0
    %1100 = vmatprep.subr.mxu0 0.0
    %1101 = vmatpush1.msra.mxu0 0.0
    %1102 = vmatprep.subr.mxu0 0.0
    %1103 = vmatpush1.msra.mxu0 0.0
    %1104 = vmatprep.mubr.f32.mxu0 0.0
    %1105 = vmatmul.mubr.f32.gmra.mrb[0].mxu0 %v942
    %v1106 = vpop.f32.mrb[0].mxu0
    %v1107 = vadd.f32 0.0, %v1106
    %v1108 = vpop.f32.mrb[0].mxu0
    %1109 = vdwg.mxu0
    %v1110 = vadd.f32 %v196, %v1107
    %v1111 = vxor.u32 %v1110, 2147483648
    %v1112 = vmul.f32 %v1111, 1.442695
    %v1113 = vpow.pop %v1112
    %v1114 = vadd.f32 %v1113, 1.0
    %v1115 = vrcp.pop %v1114
    %v1116 = vmul.f32 1.0, %v1115
    %v1117 = vmul.f32 %v1116, 2.0
    %v1118 = vsub.f32 %v1117, 1.0
    %v1119 = vmul.f32 %v1116, %v857
    %1121 = vrot.lane.b32.xlu0 %v1118, 64
    %v1122 = vpop.permute.xlu0 %1121
    %v1124 = vmul.f32 %v1116, %v1122
    %1126 = vrot.lane.b32.xlu0 %v1124, 32
    %v1127 = vpop.permute.xlu0 %1126
    %v1129 = vadd.f32 %v1119, %v1127
    %v1130 = vtanh.pop %v1129
    %1132 = vrot.lane.b32.xlu0 %v1130, 64
    %v1133 = vpop.permute.xlu0 %1132
    %v1135 = vmul.f32 %v1116, %v1133
    %1137 = vrot.lane.b32.xlu0 %v1039, 32
    %v1138 = vpop.permute.xlu0 %1137
    %v1139 = vsel %vm219, %v1138, 0
    %1141 = vmatprep.subr.mxu0 0.0
    %1142 = vmatpush1.msra.mxu0 %v65
    %1143 = vmatprep.subr.mxu0 0.0
    %1144 = vmatpush1.msra.mxu0 %v66
    %1145 = vmatprep.subr.mxu0 0.0
    %1146 = vmatpush1.msra.mxu0 %v67
    %1147 = vmatprep.subr.mxu0 0.0
    %1148 = vmatpush1.msra.mxu0 %v68
    %1149 = vmatprep.subr.mxu0 0.0
    %1150 = vmatpush1.msra.mxu0 0.0
    %1151 = vmatprep.subr.mxu0 0.0
    %1152 = vmatpush1.msra.mxu0 0.0
    %1153 = vmatprep.subr.mxu0 0.0
    %1154 = vmatpush1.msra.mxu0 0.0
    %1155 = vmatprep.subr.mxu0 0.0
    %1156 = vmatpush1.msra.mxu0 0.0
    %1157 = vmatprep.subr.mxu0 0.0
    %1158 = vmatpush1.msra.mxu0 0.0
    %1159 = vmatprep.subr.mxu0 0.0
    %1160 = vmatpush1.msra.mxu0 0.0
    %1161 = vmatprep.subr.mxu0 0.0
    %1162 = vmatpush1.msra.mxu0 0.0
    %1163 = vmatprep.subr.mxu0 0.0
    %1164 = vmatpush1.msra.mxu0 0.0
    %1165 = vmatprep.subr.mxu0 0.0
    %1166 = vmatpush1.msra.mxu0 0.0
    %1167 = vmatprep.subr.mxu0 0.0
    %1168 = vmatpush1.msra.mxu0 0.0
    %1169 = vmatprep.subr.mxu0 0.0
    %1170 = vmatpush1.msra.mxu0 0.0
    %1171 = vmatprep.subr.mxu0 0.0
    %1172 = vmatpush1.msra.mxu0 0.0
    %1173 = vmatprep.subr.mxu0 0.0
    %1174 = vmatpush1.msra.mxu0 0.0
    %1175 = vmatprep.subr.mxu0 0.0
    %1176 = vmatpush1.msra.mxu0 0.0
    %1177 = vmatprep.subr.mxu0 0.0
    %1178 = vmatpush1.msra.mxu0 0.0
    %1179 = vmatprep.subr.mxu0 0.0
    %1180 = vmatpush1.msra.mxu0 0.0
    %1181 = vmatprep.subr.mxu0 0.0
    %1182 = vmatpush1.msra.mxu0 0.0
    %1183 = vmatprep.subr.mxu0 0.0
    %1184 = vmatpush1.msra.mxu0 0.0
    %1185 = vmatprep.subr.mxu0 0.0
    %1186 = vmatpush1.msra.mxu0 0.0
    %1187 = vmatprep.subr.mxu0 0.0
    %1188 = vmatpush1.msra.mxu0 0.0
    %1189 = vmatprep.subr.mxu0 0.0
    %1190 = vmatpush1.msra.mxu0 0.0
    %1191 = vmatprep.subr.mxu0 0.0
    %1192 = vmatpush1.msra.mxu0 0.0
    %1193 = vmatprep.subr.mxu0 0.0
    %1194 = vmatpush1.msra.mxu0 0.0
    %1195 = vmatprep.subr.mxu0 0.0
    %1196 = vmatpush1.msra.mxu0 0.0
    %1197 = vmatprep.subr.mxu0 0.0
    %1198 = vmatpush1.msra.mxu0 0.0
    %1199 = vmatprep.subr.mxu0 0.0
    %1200 = vmatpush1.msra.mxu0 0.0
    %1201 = vmatprep.subr.mxu0 0.0
    %1202 = vmatpush1.msra.mxu0 0.0
    %1203 = vmatprep.subr.mxu0 0.0
    %1204 = vmatpush1.msra.mxu0 0.0
    %1205 = vmatprep.mubr.f32.mxu0 0.0
    %1206 = vmatmul.mubr.f32.gmra.mrb[0].mxu0 %v1139
    %v1207 = vpop.f32.mrb[0].mxu0
    %v1208 = vadd.f32 0.0, %v1207
    %v1209 = vpop.f32.mrb[0].mxu0
    %1210 = vdwg.mxu0
    %1212 = vrot.lane.b32.xlu0 %v1135, 32
    %v1213 = vpop.permute.xlu0 %1212
    %v1214 = vsel %vm219, %v1213, 0
    %1216 = vmatprep.subr.mxu0 0.0
    %1217 = vmatpush1.msra.mxu0 %v57
    %1218 = vmatprep.subr.mxu0 0.0
    %1219 = vmatpush1.msra.mxu0 %v58
    %1220 = vmatprep.subr.mxu0 0.0
    %1221 = vmatpush1.msra.mxu0 %v59
    %1222 = vmatprep.subr.mxu0 0.0
    %1223 = vmatpush1.msra.mxu0 %v60
    %1224 = vmatprep.subr.mxu0 0.0
    %1225 = vmatpush1.msra.mxu0 0.0
    %1226 = vmatprep.subr.mxu0 0.0
    %1227 = vmatpush1.msra.mxu0 0.0
    %1228 = vmatprep.subr.mxu0 0.0
    %1229 = vmatpush1.msra.mxu0 0.0
    %1230 = vmatprep.subr.mxu0 0.0
    %1231 = vmatpush1.msra.mxu0 0.0
    %1232 = vmatprep.subr.mxu0 0.0
    %1233 = vmatpush1.msra.mxu0 0.0
    %1234 = vmatprep.subr.mxu0 0.0
    %1235 = vmatpush1.msra.mxu0 0.0
    %1236 = vmatprep.subr.mxu0 0.0
    %1237 = vmatpush1.msra.mxu0 0.0
    %1238 = vmatprep.subr.mxu0 0.0
    %1239 = vmatpush1.msra.mxu0 0.0
    %1240 = vmatprep.subr.mxu0 0.0
    %1241 = vmatpush1.msra.mxu0 0.0
    %1242 = vmatprep.subr.mxu0 0.0
    %1243 = vmatpush1.msra.mxu0 0.0
    %1244 = vmatprep.subr.mxu0 0.0
    %1245 = vmatpush1.msra.mxu0 0.0
    %1246 = vmatprep.subr.mxu0 0.0
    %1247 = vmatpush1.msra.mxu0 0.0
    %1248 = vmatprep.subr.mxu0 0.0
    %1249 = vmatpush1.msra.mxu0 0.0
    %1250 = vmatprep.subr.mxu0 0.0
    %1251 = vmatpush1.msra.mxu0 0.0
    %1252 = vmatprep.subr.mxu0 0.0
    %1253 = vmatpush1.msra.mxu0 0.0
    %1254 = vmatprep.subr.mxu0 0.0
    %1255 = vmatpush1.msra.mxu0 0.0
    %1256 = vmatprep.subr.mxu0 0.0
    %1257 = vmatpush1.msra.mxu0 0.0
    %1258 = vmatprep.subr.mxu0 0.0
    %1259 = vmatpush1.msra.mxu0 0.0
    %1260 = vmatprep.subr.mxu0 0.0
    %1261 = vmatpush1.msra.mxu0 0.0
    %1262 = vmatprep.subr.mxu0 0.0
    %1263 = vmatpush1.msra.mxu0 0.0
    %1264 = vmatprep.subr.mxu0 0.0
    %1265 = vmatpush1.msra.mxu0 0.0
    %1266 = vmatprep.subr.mxu0 0.0
    %1267 = vmatpush1.msra.mxu0 0.0
    %1268 = vmatprep.subr.mxu0 0.0
    %1269 = vmatpush1.msra.mxu0 0.0
    %1270 = vmatprep.subr.mxu0 0.0
    %1271 = vmatpush1.msra.mxu0 0.0
    %1272 = vmatprep.subr.mxu0 0.0
    %1273 = vmatpush1.msra.mxu0 0.0
    %1274 = vmatprep.subr.mxu0 0.0
    %1275 = vmatpush1.msra.mxu0 0.0
    %1276 = vmatprep.subr.mxu0 0.0
    %1277 = vmatpush1.msra.mxu0 0.0
    %1278 = vmatprep.subr.mxu0 0.0
    %1279 = vmatpush1.msra.mxu0 0.0
    %1280 = vmatprep.mubr.f32.mxu0 0.0
    %1281 = vmatmul.mubr.f32.gmra.mrb[0].mxu0 %v1214
    %v1282 = vpop.f32.mrb[0].mxu0
    %v1283 = vadd.f32 %v1208, %v1282
    %v1284 = vpop.f32.mrb[0].mxu0
    %1285 = vdwg.mxu0
    %v1286 = vadd.f32 %v1283, %v468
    %v1287 = vxor.u32 %v1286, 2147483648
    %v1288 = vmul.f32 %v1287, 1.442695
    %v1289 = vpow.pop %v1288
    %v1290 = vadd.f32 %v1289, 1.0
    %v1291 = vrcp.pop %v1290
    %v1292 = vmul.f32 1.0, %v1291
    %v1293 = vmul.f32 %v1292, 2.0
    %v1294 = vsub.f32 %v1293, 1.0
    %v1295 = vmul.f32 %v1292, %v1033
    %1297 = vrot.lane.b32.xlu0 %v1294, 64
    %v1298 = vpop.permute.xlu0 %1297
    %v1300 = vmul.f32 %v1292, %v1298
    %1302 = vrot.lane.b32.xlu0 %v1300, 32
    %v1303 = vpop.permute.xlu0 %1302
    %v1305 = vadd.f32 %v1295, %v1303
    %v1306 = vtanh.pop %v1305
    %1308 = vrot.lane.b32.xlu0 %v1306, 64
    %v1309 = vpop.permute.xlu0 %1308
    %v1311 = vmul.f32 %v1292, %v1309
    %1312 = vmatprep.subr.mxu0 0.0
    %1313 = vmatpush1.msra.mxu0 %v61
    %1314 = vmatprep.subr.mxu0 0.0
    %1315 = vmatpush1.msra.mxu0 %v62
    %1316 = vmatprep.subr.mxu0 0.0
    %1317 = vmatpush1.msra.mxu0 %v63
    %1318 = vmatprep.subr.mxu0 0.0
    %1319 = vmatpush1.msra.mxu0 %v64
    %1320 = vmatprep.subr.mxu0 0.0
    %1321 = vmatpush1.msra.mxu0 0.0
    %1322 = vmatprep.subr.mxu0 0.0
    %1323 = vmatpush1.msra.mxu0 0.0
    %1324 = vmatprep.subr.mxu0 0.0
    %1325 = vmatpush1.msra.mxu0 0.0
    %1326 = vmatprep.subr.mxu0 0.0
    %1327 = vmatpush1.msra.mxu0 0.0
    %1328 = vmatprep.subr.mxu0 0.0
    %1329 = vmatpush1.msra.mxu0 0.0
    %1330 = vmatprep.subr.mxu0 0.0
    %1331 = vmatpush1.msra.mxu0 0.0
    %1332 = vmatprep.subr.mxu0 0.0
    %1333 = vmatpush1.msra.mxu0 0.0
    %1334 = vmatprep.subr.mxu0 0.0
    %1335 = vmatpush1.msra.mxu0 0.0
    %1336 = vmatprep.subr.mxu0 0.0
    %1337 = vmatpush1.msra.mxu0 0.0
    %1338 = vmatprep.subr.mxu0 0.0
    %1339 = vmatpush1.msra.mxu0 0.0
    %1340 = vmatprep.subr.mxu0 0.0
    %1341 = vmatpush1.msra.mxu0 0.0
    %1342 = vmatprep.subr.mxu0 0.0
    %1343 = vmatpush1.msra.mxu0 0.0
    %1344 = vmatprep.subr.mxu0 0.0
    %1345 = vmatpush1.msra.mxu0 0.0
    %1346 = vmatprep.subr.mxu0 0.0
    %1347 = vmatpush1.msra.mxu0 0.0
    %1348 = vmatprep.subr.mxu0 0.0
    %1349 = vmatpush1.msra.mxu0 0.0
    %1350 = vmatprep.subr.mxu0 0.0
    %1351 = vmatpush1.msra.mxu0 0.0
    %1352 = vmatprep.subr.mxu0 0.0
    %1353 = vmatpush1.msra.mxu0 0.0
    %1354 = vmatprep.subr.mxu0 0.0
    %1355 = vmatpush1.msra.mxu0 0.0
    %1356 = vmatprep.subr.mxu0 0.0
    %1357 = vmatpush1.msra.mxu0 0.0
    %1358 = vmatprep.subr.mxu0 0.0
    %1359 = vmatpush1.msra.mxu0 0.0
    %1360 = vmatprep.subr.mxu0 0.0
    %1361 = vmatpush1.msra.mxu0 0.0
    %1362 = vmatprep.subr.mxu0 0.0
    %1363 = vmatpush1.msra.mxu0 0.0
    %1364 = vmatprep.subr.mxu0 0.0
    %1365 = vmatpush1.msra.mxu0 0.0
    %1366 = vmatprep.subr.mxu0 0.0
    %1367 = vmatpush1.msra.mxu0 0.0
    %1368 = vmatprep.subr.mxu0 0.0
    %1369 = vmatpush1.msra.mxu0 0.0
    %1370 = vmatprep.subr.mxu0 0.0
    %1371 = vmatpush1.msra.mxu0 0.0
    %1372 = vmatprep.subr.mxu0 0.0
    %1373 = vmatpush1.msra.mxu0 0.0
    %1374 = vmatprep.subr.mxu0 0.0
    %1375 = vmatpush1.msra.mxu0 0.0
    %1376 = vmatprep.mubr.f32.mxu0 0.0
    %1377 = vmatmul.mubr.f32.gmra.mrb[0].mxu0 %v1214
    %v1378 = vpop.f32.mrb[0].mxu0
    %v1379 = vadd.f32 0.0, %v1378
    %v1380 = vpop.f32.mrb[0].mxu0
    %1381 = vdwg.mxu0
    %v1382 = vadd.f32 %v201, %v1379
    %v1383 = vxor.u32 %v1382, 2147483648
    %v1384 = vmul.f32 %v1383, 1.442695
    %v1385 = vpow.pop %v1384
    %v1386 = vadd.f32 %v1385, 1.0
    %v1387 = vrcp.pop %v1386
    %v1388 = vmul.f32 1.0, %v1387
    %v1389 = vmul.f32 %v1388, 2.0
    %v1390 = vsub.f32 %v1389, 1.0
    %v1391 = vmul.f32 %v1388, %v1129
    %1393 = vrot.lane.b32.xlu0 %v1390, 64
    %v1394 = vpop.permute.xlu0 %1393
    %v1396 = vmul.f32 %v1388, %v1394
    %1398 = vrot.lane.b32.xlu0 %v1396, 32
    %v1399 = vpop.permute.xlu0 %1398
    %v1401 = vadd.f32 %v1391, %v1399
    %v1402 = vtanh.pop %v1401
    %1404 = vrot.lane.b32.xlu0 %v1402, 64
    %v1405 = vpop.permute.xlu0 %1404
    %v1407 = vmul.f32 %v1388, %v1405
    %1409 = vrot.lane.b32.xlu0 %v1311, 32
    %v1410 = vpop.permute.xlu0 %1409
    %v1411 = vsel %vm219, %v1410, 0
    %1413 = vmatprep.subr.mxu0 0.0
    %1414 = vmatpush1.msra.mxu0 %v65
    %1415 = vmatprep.subr.mxu0 0.0
    %1416 = vmatpush1.msra.mxu0 %v66
    %1417 = vmatprep.subr.mxu0 0.0
    %1418 = vmatpush1.msra.mxu0 %v67
    %1419 = vmatprep.subr.mxu0 0.0
    %1420 = vmatpush1.msra.mxu0 %v68
    %1421 = vmatprep.subr.mxu0 0.0
    %1422 = vmatpush1.msra.mxu0 0.0
    %1423 = vmatprep.subr.mxu0 0.0
    %1424 = vmatpush1.msra.mxu0 0.0
    %1425 = vmatprep.subr.mxu0 0.0
    %1426 = vmatpush1.msra.mxu0 0.0
    %1427 = vmatprep.subr.mxu0 0.0
    %1428 = vmatpush1.msra.mxu0 0.0
    %1429 = vmatprep.subr.mxu0 0.0
    %1430 = vmatpush1.msra.mxu0 0.0
    %1431 = vmatprep.subr.mxu0 0.0
    %1432 = vmatpush1.msra.mxu0 0.0
    %1433 = vmatprep.subr.mxu0 0.0
    %1434 = vmatpush1.msra.mxu0 0.0
    %1435 = vmatprep.subr.mxu0 0.0
    %1436 = vmatpush1.msra.mxu0 0.0
    %1437 = vmatprep.subr.mxu0 0.0
    %1438 = vmatpush1.msra.mxu0 0.0
    %1439 = vmatprep.subr.mxu0 0.0
    %1440 = vmatpush1.msra.mxu0 0.0
    %1441 = vmatprep.subr.mxu0 0.0
    %1442 = vmatpush1.msra.mxu0 0.0
    %1443 = vmatprep.subr.mxu0 0.0
    %1444 = vmatpush1.msra.mxu0 0.0
    %1445 = vmatprep.subr.mxu0 0.0
    %1446 = vmatpush1.msra.mxu0 0.0
    %1447 = vmatprep.subr.mxu0 0.0
    %1448 = vmatpush1.msra.mxu0 0.0
    %1449 = vmatprep.subr.mxu0 0.0
    %1450 = vmatpush1.msra.mxu0 0.0
    %1451 = vmatprep.subr.mxu0 0.0
    %1452 = vmatpush1.msra.mxu0 0.0
    %1453 = vmatprep.subr.mxu0 0.0
    %1454 = vmatpush1.msra.mxu0 0.0
    %1455 = vmatprep.subr.mxu0 0.0
    %1456 = vmatpush1.msra.mxu0 0.0
    %1457 = vmatprep.subr.mxu0 0.0
    %1458 = vmatpush1.msra.mxu0 0.0
    %1459 = vmatprep.subr.mxu0 0.0
    %1460 = vmatpush1.msra.mxu0 0.0
    %1461 = vmatprep.subr.mxu0 0.0
    %1462 = vmatpush1.msra.mxu0 0.0
    %1463 = vmatprep.subr.mxu0 0.0
    %1464 = vmatpush1.msra.mxu0 0.0
    %1465 = vmatprep.subr.mxu0 0.0
    %1466 = vmatpush1.msra.mxu0 0.0
    %1467 = vmatprep.subr.mxu0 0.0
    %1468 = vmatpush1.msra.mxu0 0.0
    %1469 = vmatprep.subr.mxu0 0.0
    %1470 = vmatpush1.msra.mxu0 0.0
    %1471 = vmatprep.subr.mxu0 0.0
    %1472 = vmatpush1.msra.mxu0 0.0
    %1473 = vmatprep.subr.mxu0 0.0
    %1474 = vmatpush1.msra.mxu0 0.0
    %1475 = vmatprep.subr.mxu0 0.0
    %1476 = vmatpush1.msra.mxu0 0.0
    %1477 = vmatprep.mubr.f32.mxu0 0.0
    %1478 = vmatmul.mubr.f32.gmra.mrb[0].mxu0 %v1411
    %v1479 = vpop.f32.mrb[0].mxu0
    %v1480 = vadd.f32 0.0, %v1479
    %v1481 = vpop.f32.mrb[0].mxu0
    %1482 = vdwg.mxu0
    %1484 = vrot.lane.b32.xlu0 %v1407, 32
    %v1485 = vpop.permute.xlu0 %1484
    %v1486 = vsel %vm219, %v1485, 0
    %1488 = vmatprep.subr.mxu0 0.0
    %1489 = vmatpush1.msra.mxu0 %v57
    %1490 = vmatprep.subr.mxu0 0.0
    %1491 = vmatpush1.msra.mxu0 %v58
    %1492 = vmatprep.subr.mxu0 0.0
    %1493 = vmatpush1.msra.mxu0 %v59
    %1494 = vmatprep.subr.mxu0 0.0
    %1495 = vmatpush1.msra.mxu0 %v60
    %1496 = vmatprep.subr.mxu0 0.0
    %1497 = vmatpush1.msra.mxu0 0.0
    %1498 = vmatprep.subr.mxu0 0.0
    %1499 = vmatpush1.msra.mxu0 0.0
    %1500 = vmatprep.subr.mxu0 0.0
    %1501 = vmatpush1.msra.mxu0 0.0
    %1502 = vmatprep.subr.mxu0 0.0
    %1503 = vmatpush1.msra.mxu0 0.0
    %1504 = vmatprep.subr.mxu0 0.0
    %1505 = vmatpush1.msra.mxu0 0.0
    %1506 = vmatprep.subr.mxu0 0.0
    %1507 = vmatpush1.msra.mxu0 0.0
    %1508 = vmatprep.subr.mxu0 0.0
    %1509 = vmatpush1.msra.mxu0 0.0
    %1510 = vmatprep.subr.mxu0 0.0
    %1511 = vmatpush1.msra.mxu0 0.0
    %1512 = vmatprep.subr.mxu0 0.0
    %1513 = vmatpush1.msra.mxu0 0.0
    %1514 = vmatprep.subr.mxu0 0.0
    %1515 = vmatpush1.msra.mxu0 0.0
    %1516 = vmatprep.subr.mxu0 0.0
    %1517 = vmatpush1.msra.mxu0 0.0
    %1518 = vmatprep.subr.mxu0 0.0
    %1519 = vmatpush1.msra.mxu0 0.0
    %1520 = vmatprep.subr.mxu0 0.0
    %1521 = vmatpush1.msra.mxu0 0.0
    %1522 = vmatprep.subr.mxu0 0.0
    %1523 = vmatpush1.msra.mxu0 0.0
    %1524 = vmatprep.subr.mxu0 0.0
    %1525 = vmatpush1.msra.mxu0 0.0
    %1526 = vmatprep.subr.mxu0 0.0
    %1527 = vmatpush1.msra.mxu0 0.0
    %1528 = vmatprep.subr.mxu0 0.0
    %1529 = vmatpush1.msra.mxu0 0.0
    %1530 = vmatprep.subr.mxu0 0.0
    %1531 = vmatpush1.msra.mxu0 0.0
    %1532 = vmatprep.subr.mxu0 0.0
    %1533 = vmatpush1.msra.mxu0 0.0
    %1534 = vmatprep.subr.mxu0 0.0
    %1535 = vmatpush1.msra.mxu0 0.0
    %1536 = vmatprep.subr.mxu0 0.0
    %1537 = vmatpush1.msra.mxu0 0.0
    %1538 = vmatprep.subr.mxu0 0.0
    %1539 = vmatpush1.msra.mxu0 0.0
    %1540 = vmatprep.subr.mxu0 0.0
    %1541 = vmatpush1.msra.mxu0 0.0
    %1542 = vmatprep.subr.mxu0 0.0
    %1543 = vmatpush1.msra.mxu0 0.0
    %1544 = vmatprep.subr.mxu0 0.0
    %1545 = vmatpush1.msra.mxu0 0.0
    %1546 = vmatprep.subr.mxu0 0.0
    %1547 = vmatpush1.msra.mxu0 0.0
    %1548 = vmatprep.subr.mxu0 0.0
    %1549 = vmatpush1.msra.mxu0 0.0
    %1550 = vmatprep.subr.mxu0 0.0
    %1551 = vmatpush1.msra.mxu0 0.0
    %1552 = vmatprep.mubr.f32.mxu0 0.0
    %1553 = vmatmul.mubr.f32.gmra.mrb[0].mxu0 %v1486
    %v1554 = vpop.f32.mrb[0].mxu0
    %v1555 = vadd.f32 %v1480, %v1554
    %v1556 = vpop.f32.mrb[0].mxu0
    %1557 = vdwg.mxu0
    %v1558 = vadd.f32 %v1555, %v468
    %v1559 = vxor.u32 %v1558, 2147483648
    %v1560 = vmul.f32 %v1559, 1.442695
    %v1561 = vpow.pop %v1560
    %v1562 = vadd.f32 %v1561, 1.0
    %v1563 = vrcp.pop %v1562
    %v1564 = vmul.f32 1.0, %v1563
    %v1565 = vmul.f32 %v1564, 2.0
    %v1566 = vsub.f32 %v1565, 1.0
    %v1567 = vmul.f32 %v1564, %v1305
    %1569 = vrot.lane.b32.xlu0 %v1566, 64
    %v1570 = vpop.permute.xlu0 %1569
    %v1572 = vmul.f32 %v1564, %v1570
    %1574 = vrot.lane.b32.xlu0 %v1572, 32
    %v1575 = vpop.permute.xlu0 %1574
    %v1577 = vadd.f32 %v1567, %v1575
    %v1578 = vtanh.pop %v1577
    %1580 = vrot.lane.b32.xlu0 %v1578, 64
    %v1581 = vpop.permute.xlu0 %1580
    %v1583 = vmul.f32 %v1564, %v1581
    %1584 = vmatprep.subr.mxu0 0.0
    %1585 = vmatpush1.msra.mxu0 %v61
    %1586 = vmatprep.subr.mxu0 0.0
    %1587 = vmatpush1.msra.mxu0 %v62
    %1588 = vmatprep.subr.mxu0 0.0
    %1589 = vmatpush1.msra.mxu0 %v63
    %1590 = vmatprep.subr.mxu0 0.0
    %1591 = vmatpush1.msra.mxu0 %v64
    %1592 = vmatprep.subr.mxu0 0.0
    %1593 = vmatpush1.msra.mxu0 0.0
    %1594 = vmatprep.subr.mxu0 0.0
    %1595 = vmatpush1.msra.mxu0 0.0
    %1596 = vmatprep.subr.mxu0 0.0
    %1597 = vmatpush1.msra.mxu0 0.0
    %1598 = vmatprep.subr.mxu0 0.0
    %1599 = vmatpush1.msra.mxu0 0.0
    %1600 = vmatprep.subr.mxu0 0.0
    %1601 = vmatpush1.msra.mxu0 0.0
    %1602 = vmatprep.subr.mxu0 0.0
    %1603 = vmatpush1.msra.mxu0 0.0
    %1604 = vmatprep.subr.mxu0 0.0
    %1605 = vmatpush1.msra.mxu0 0.0
    %1606 = vmatprep.subr.mxu0 0.0
    %1607 = vmatpush1.msra.mxu0 0.0
    %1608 = vmatprep.subr.mxu0 0.0
    %1609 = vmatpush1.msra.mxu0 0.0
    %1610 = vmatprep.subr.mxu0 0.0
    %1611 = vmatpush1.msra.mxu0 0.0
    %1612 = vmatprep.subr.mxu0 0.0
    %1613 = vmatpush1.msra.mxu0 0.0
    %1614 = vmatprep.subr.mxu0 0.0
    %1615 = vmatpush1.msra.mxu0 0.0
    %1616 = vmatprep.subr.mxu0 0.0
    %1617 = vmatpush1.msra.mxu0 0.0
    %1618 = vmatprep.subr.mxu0 0.0
    %1619 = vmatpush1.msra.mxu0 0.0
    %1620 = vmatprep.subr.mxu0 0.0
    %1621 = vmatpush1.msra.mxu0 0.0
    %1622 = vmatprep.subr.mxu0 0.0
    %1623 = vmatpush1.msra.mxu0 0.0
    %1624 = vmatprep.subr.mxu0 0.0
    %1625 = vmatpush1.msra.mxu0 0.0
    %1626 = vmatprep.subr.mxu0 0.0
    %1627 = vmatpush1.msra.mxu0 0.0
    %1628 = vmatprep.subr.mxu0 0.0
    %1629 = vmatpush1.msra.mxu0 0.0
    %1630 = vmatprep.subr.mxu0 0.0
    %1631 = vmatpush1.msra.mxu0 0.0
    %1632 = vmatprep.subr.mxu0 0.0
    %1633 = vmatpush1.msra.mxu0 0.0
    %1634 = vmatprep.subr.mxu0 0.0
    %1635 = vmatpush1.msra.mxu0 0.0
    %1636 = vmatprep.subr.mxu0 0.0
    %1637 = vmatpush1.msra.mxu0 0.0
    %1638 = vmatprep.subr.mxu0 0.0
    %1639 = vmatpush1.msra.mxu0 0.0
    %1640 = vmatprep.subr.mxu0 0.0
    %1641 = vmatpush1.msra.mxu0 0.0
    %1642 = vmatprep.subr.mxu0 0.0
    %1643 = vmatpush1.msra.mxu0 0.0
    %1644 = vmatprep.subr.mxu0 0.0
    %1645 = vmatpush1.msra.mxu0 0.0
    %1646 = vmatprep.subr.mxu0 0.0
    %1647 = vmatpush1.msra.mxu0 0.0
    %1648 = vmatprep.mubr.f32.mxu0 0.0
    %1649 = vmatmul.mubr.f32.gmra.mrb[0].mxu0 %v1486
    %v1650 = vpop.f32.mrb[0].mxu0
    %v1651 = vadd.f32 0.0, %v1650
    %v1652 = vpop.f32.mrb[0].mxu0
    %1653 = vdwg.mxu0
    %v1654 = vadd.f32 %v206, %v1651
    %v1655 = vxor.u32 %v1654, 2147483648
    %v1656 = vmul.f32 %v1655, 1.442695
    %v1657 = vpow.pop %v1656
    %v1658 = vadd.f32 %v1657, 1.0
    %v1659 = vrcp.pop %v1658
    %v1660 = vmul.f32 1.0, %v1659
    %v1661 = vmul.f32 %v1660, 2.0
    %v1662 = vsub.f32 %v1661, 1.0
    %v1663 = vmul.f32 %v1660, %v1401
    %1665 = vrot.lane.b32.xlu0 %v1662, 64
    %v1666 = vpop.permute.xlu0 %1665
    %v1668 = vmul.f32 %v1660, %v1666
    %1670 = vrot.lane.b32.xlu0 %v1668, 32
    %v1671 = vpop.permute.xlu0 %1670
    %v1673 = vadd.f32 %v1663, %v1671
    %v1674 = vtanh.pop %v1673
    %1676 = vrot.lane.b32.xlu0 %v1674, 64
    %v1677 = vpop.permute.xlu0 %1676
    %v1679 = vmul.f32 %v1660, %v1677
    %1681 = vrot.lane.b32.xlu0 %v1583, 32
    %v1682 = vpop.permute.xlu0 %1681
    %v1683 = vsel %vm219, %v1682, 0
    %1685 = vmatprep.subr.mxu0 0.0
    %1686 = vmatpush1.msra.mxu0 %v65
    %1687 = vmatprep.subr.mxu0 0.0
    %1688 = vmatpush1.msra.mxu0 %v66
    %1689 = vmatprep.subr.mxu0 0.0
    %1690 = vmatpush1.msra.mxu0 %v67
    %1691 = vmatprep.subr.mxu0 0.0
    %1692 = vmatpush1.msra.mxu0 %v68
    %1693 = vmatprep.subr.mxu0 0.0
    %1694 = vmatpush1.msra.mxu0 0.0
    %1695 = vmatprep.subr.mxu0 0.0
    %1696 = vmatpush1.msra.mxu0 0.0
    %1697 = vmatprep.subr.mxu0 0.0
    %1698 = vmatpush1.msra.mxu0 0.0
    %1699 = vmatprep.subr.mxu0 0.0
    %1700 = vmatpush1.msra.mxu0 0.0
    %1701 = vmatprep.subr.mxu0 0.0
    %1702 = vmatpush1.msra.mxu0 0.0
    %1703 = vmatprep.subr.mxu0 0.0
    %1704 = vmatpush1.msra.mxu0 0.0
    %1705 = vmatprep.subr.mxu0 0.0
    %1706 = vmatpush1.msra.mxu0 0.0
    %1707 = vmatprep.subr.mxu0 0.0
    %1708 = vmatpush1.msra.mxu0 0.0
    %1709 = vmatprep.subr.mxu0 0.0
    %1710 = vmatpush1.msra.mxu0 0.0
    %1711 = vmatprep.subr.mxu0 0.0
    %1712 = vmatpush1.msra.mxu0 0.0
    %1713 = vmatprep.subr.mxu0 0.0
    %1714 = vmatpush1.msra.mxu0 0.0
    %1715 = vmatprep.subr.mxu0 0.0
    %1716 = vmatpush1.msra.mxu0 0.0
    %1717 = vmatprep.subr.mxu0 0.0
    %1718 = vmatpush1.msra.mxu0 0.0
    %1719 = vmatprep.subr.mxu0 0.0
    %1720 = vmatpush1.msra.mxu0 0.0
    %1721 = vmatprep.subr.mxu0 0.0
    %1722 = vmatpush1.msra.mxu0 0.0
    %1723 = vmatprep.subr.mxu0 0.0
    %1724 = vmatpush1.msra.mxu0 0.0
    %1725 = vmatprep.subr.mxu0 0.0
    %1726 = vmatpush1.msra.mxu0 0.0
    %1727 = vmatprep.subr.mxu0 0.0
    %1728 = vmatpush1.msra.mxu0 0.0
    %1729 = vmatprep.subr.mxu0 0.0
    %1730 = vmatpush1.msra.mxu0 0.0
    %1731 = vmatprep.subr.mxu0 0.0
    %1732 = vmatpush1.msra.mxu0 0.0
    %1733 = vmatprep.subr.mxu0 0.0
    %1734 = vmatpush1.msra.mxu0 0.0
    %1735 = vmatprep.subr.mxu0 0.0
    %1736 = vmatpush1.msra.mxu0 0.0
    %1737 = vmatprep.subr.mxu0 0.0
    %1738 = vmatpush1.msra.mxu0 0.0
    %1739 = vmatprep.subr.mxu0 0.0
    %1740 = vmatpush1.msra.mxu0 0.0
    %1741 = vmatprep.subr.mxu0 0.0
    %1742 = vmatpush1.msra.mxu0 0.0
    %1743 = vmatprep.subr.mxu0 0.0
    %1744 = vmatpush1.msra.mxu0 0.0
    %1745 = vmatprep.subr.mxu0 0.0
    %1746 = vmatpush1.msra.mxu0 0.0
    %1747 = vmatprep.subr.mxu0 0.0
    %1748 = vmatpush1.msra.mxu0 0.0
    %1749 = vmatprep.mubr.f32.mxu0 0.0
    %1750 = vmatmul.mubr.f32.gmra.mrb[0].mxu0 %v1683
    %v1751 = vpop.f32.mrb[0].mxu0
    %v1752 = vadd.f32 0.0, %v1751
    %v1753 = vpop.f32.mrb[0].mxu0
    %1754 = vdwg.mxu0
    %1756 = vrot.lane.b32.xlu0 %v1679, 32
    %v1757 = vpop.permute.xlu0 %1756
    %v1758 = vsel %vm219, %v1757, 0
    %1760 = vmatprep.subr.mxu0 0.0
    %1761 = vmatpush1.msra.mxu0 %v57
    %1762 = vmatprep.subr.mxu0 0.0
    %1763 = vmatpush1.msra.mxu0 %v58
    %1764 = vmatprep.subr.mxu0 0.0
    %1765 = vmatpush1.msra.mxu0 %v59
    %1766 = vmatprep.subr.mxu0 0.0
    %1767 = vmatpush1.msra.mxu0 %v60
    %1768 = vmatprep.subr.mxu0 0.0
    %1769 = vmatpush1.msra.mxu0 0.0
    %1770 = vmatprep.subr.mxu0 0.0
    %1771 = vmatpush1.msra.mxu0 0.0
    %1772 = vmatprep.subr.mxu0 0.0
    %1773 = vmatpush1.msra.mxu0 0.0
    %1774 = vmatprep.subr.mxu0 0.0
    %1775 = vmatpush1.msra.mxu0 0.0
    %1776 = vmatprep.subr.mxu0 0.0
    %1777 = vmatpush1.msra.mxu0 0.0
    %1778 = vmatprep.subr.mxu0 0.0
    %1779 = vmatpush1.msra.mxu0 0.0
    %1780 = vmatprep.subr.mxu0 0.0
    %1781 = vmatpush1.msra.mxu0 0.0
    %1782 = vmatprep.subr.mxu0 0.0
    %1783 = vmatpush1.msra.mxu0 0.0
    %1784 = vmatprep.subr.mxu0 0.0
    %1785 = vmatpush1.msra.mxu0 0.0
    %1786 = vmatprep.subr.mxu0 0.0
    %1787 = vmatpush1.msra.mxu0 0.0
    %1788 = vmatprep.subr.mxu0 0.0
    %1789 = vmatpush1.msra.mxu0 0.0
    %1790 = vmatprep.subr.mxu0 0.0
    %1791 = vmatpush1.msra.mxu0 0.0
    %1792 = vmatprep.subr.mxu0 0.0
    %1793 = vmatpush1.msra.mxu0 0.0
    %1794 = vmatprep.subr.mxu0 0.0
    %1795 = vmatpush1.msra.mxu0 0.0
    %1796 = vmatprep.subr.mxu0 0.0
    %1797 = vmatpush1.msra.mxu0 0.0
    %1798 = vmatprep.subr.mxu0 0.0
    %1799 = vmatpush1.msra.mxu0 0.0
    %1800 = vmatprep.subr.mxu0 0.0
    %1801 = vmatpush1.msra.mxu0 0.0
    %1802 = vmatprep.subr.mxu0 0.0
    %1803 = vmatpush1.msra.mxu0 0.0
    %1804 = vmatprep.subr.mxu0 0.0
    %1805 = vmatpush1.msra.mxu0 0.0
    %1806 = vmatprep.subr.mxu0 0.0
    %1807 = vmatpush1.msra.mxu0 0.0
    %1808 = vmatprep.subr.mxu0 0.0
    %1809 = vmatpush1.msra.mxu0 0.0
    %1810 = vmatprep.subr.mxu0 0.0
    %1811 = vmatpush1.msra.mxu0 0.0
    %1812 = vmatprep.subr.mxu0 0.0
    %1813 = vmatpush1.msra.mxu0 0.0
    %1814 = vmatprep.subr.mxu0 0.0
    %1815 = vmatpush1.msra.mxu0 0.0
    %1816 = vmatprep.subr.mxu0 0.0
    %1817 = vmatpush1.msra.mxu0 0.0
    %1818 = vmatprep.subr.mxu0 0.0
    %1819 = vmatpush1.msra.mxu0 0.0
    %1820 = vmatprep.subr.mxu0 0.0
    %1821 = vmatpush1.msra.mxu0 0.0
    %1822 = vmatprep.subr.mxu0 0.0
    %1823 = vmatpush1.msra.mxu0 0.0
    %1824 = vmatprep.mubr.f32.mxu0 0.0
    %1825 = vmatmul.mubr.f32.gmra.mrb[0].mxu0 %v1758
    %v1826 = vpop.f32.mrb[0].mxu0
    %v1827 = vadd.f32 %v1752, %v1826
    %v1828 = vpop.f32.mrb[0].mxu0
    %1829 = vdwg.mxu0
    %v1830 = vadd.f32 %v1827, %v468
    %v1831 = vxor.u32 %v1830, 2147483648
    %v1832 = vmul.f32 %v1831, 1.442695
    %v1833 = vpow.pop %v1832
    %v1834 = vadd.f32 %v1833, 1.0
    %v1835 = vrcp.pop %v1834
    %v1836 = vmul.f32 1.0, %v1835
    %v1837 = vmul.f32 %v1836, 2.0
    %v1838 = vsub.f32 %v1837, 1.0
    %v1839 = vmul.f32 %v1836, %v1577
    %1841 = vrot.lane.b32.xlu0 %v1838, 64
    %v1842 = vpop.permute.xlu0 %1841
    %v1844 = vmul.f32 %v1836, %v1842
    %1846 = vrot.lane.b32.xlu0 %v1844, 32
    %v1847 = vpop.permute.xlu0 %1846
    %v1849 = vadd.f32 %v1839, %v1847
    %v1850 = vtanh.pop %v1849
    %1852 = vrot.lane.b32.xlu0 %v1850, 64
    %v1853 = vpop.permute.xlu0 %1852
    %v1855 = vmul.f32 %v1836, %v1853
    %1856 = vmatprep.subr.mxu0 0.0
    %1857 = vmatpush1.msra.mxu0 %v61
    %1858 = vmatprep.subr.mxu0 0.0
    %1859 = vmatpush1.msra.mxu0 %v62
    %1860 = vmatprep.subr.mxu0 0.0
    %1861 = vmatpush1.msra.mxu0 %v63
    %1862 = vmatprep.subr.mxu0 0.0
    %1863 = vmatpush1.msra.mxu0 %v64
    %1864 = vmatprep.subr.mxu0 0.0
    %1865 = vmatpush1.msra.mxu0 0.0
    %1866 = vmatprep.subr.mxu0 0.0
    %1867 = vmatpush1.msra.mxu0 0.0
    %1868 = vmatprep.subr.mxu0 0.0
    %1869 = vmatpush1.msra.mxu0 0.0
    %1870 = vmatprep.subr.mxu0 0.0
    %1871 = vmatpush1.msra.mxu0 0.0
    %1872 = vmatprep.subr.mxu0 0.0
    %1873 = vmatpush1.msra.mxu0 0.0
    %1874 = vmatprep.subr.mxu0 0.0
    %1875 = vmatpush1.msra.mxu0 0.0
    %1876 = vmatprep.subr.mxu0 0.0
    %1877 = vmatpush1.msra.mxu0 0.0
    %1878 = vmatprep.subr.mxu0 0.0
    %1879 = vmatpush1.msra.mxu0 0.0
    %1880 = vmatprep.subr.mxu0 0.0
    %1881 = vmatpush1.msra.mxu0 0.0
    %1882 = vmatprep.subr.mxu0 0.0
    %1883 = vmatpush1.msra.mxu0 0.0
    %1884 = vmatprep.subr.mxu0 0.0
    %1885 = vmatpush1.msra.mxu0 0.0
    %1886 = vmatprep.subr.mxu0 0.0
    %1887 = vmatpush1.msra.mxu0 0.0
    %1888 = vmatprep.subr.mxu0 0.0
    %1889 = vmatpush1.msra.mxu0 0.0
    %1890 = vmatprep.subr.mxu0 0.0
    %1891 = vmatpush1.msra.mxu0 0.0
    %1892 = vmatprep.subr.mxu0 0.0
    %1893 = vmatpush1.msra.mxu0 0.0
    %1894 = vmatprep.subr.mxu0 0.0
    %1895 = vmatpush1.msra.mxu0 0.0
    %1896 = vmatprep.subr.mxu0 0.0
    %1897 = vmatpush1.msra.mxu0 0.0
    %1898 = vmatprep.subr.mxu0 0.0
    %1899 = vmatpush1.msra.mxu0 0.0
    %1900 = vmatprep.subr.mxu0 0.0
    %1901 = vmatpush1.msra.mxu0 0.0
    %1902 = vmatprep.subr.mxu0 0.0
    %1903 = vmatpush1.msra.mxu0 0.0
    %1904 = vmatprep.subr.mxu0 0.0
    %1905 = vmatpush1.msra.mxu0 0.0
    %1906 = vmatprep.subr.mxu0 0.0
    %1907 = vmatpush1.msra.mxu0 0.0
    %1908 = vmatprep.subr.mxu0 0.0
    %1909 = vmatpush1.msra.mxu0 0.0
    %1910 = vmatprep.subr.mxu0 0.0
    %1911 = vmatpush1.msra.mxu0 0.0
    %1912 = vmatprep.subr.mxu0 0.0
    %1913 = vmatpush1.msra.mxu0 0.0
    %1914 = vmatprep.subr.mxu0 0.0
    %1915 = vmatpush1.msra.mxu0 0.0
    %1916 = vmatprep.subr.mxu0 0.0
    %1917 = vmatpush1.msra.mxu0 0.0
    %1918 = vmatprep.subr.mxu0 0.0
    %1919 = vmatpush1.msra.mxu0 0.0
    %1920 = vmatprep.mubr.f32.mxu0 0.0
    %1921 = vmatmul.mubr.f32.gmra.mrb[0].mxu0 %v1758
    %v1922 = vpop.f32.mrb[0].mxu0
    %v1923 = vadd.f32 0.0, %v1922
    %v1924 = vpop.f32.mrb[0].mxu0
    %1925 = vdwg.mxu0
    %v1926 = vadd.f32 %v211, %v1923
    %v1927 = vxor.u32 %v1926, 2147483648
    %v1928 = vmul.f32 %v1927, 1.442695
    %v1929 = vpow.pop %v1928
    %v1930 = vadd.f32 %v1929, 1.0
    %v1931 = vrcp.pop %v1930
    %v1932 = vmul.f32 1.0, %v1931
    %v1933 = vmul.f32 %v1932, 2.0
    %v1934 = vsub.f32 %v1933, 1.0
    %v1935 = vmul.f32 %v1932, %v1673
    %1937 = vrot.lane.b32.xlu0 %v1934, 64
    %v1938 = vpop.permute.xlu0 %1937
    %v1940 = vmul.f32 %v1932, %v1938
    %1942 = vrot.lane.b32.xlu0 %v1940, 32
    %v1943 = vpop.permute.xlu0 %1942
    %v1945 = vadd.f32 %v1935, %v1943
    %v1946 = vtanh.pop %v1945
    %1948 = vrot.lane.b32.xlu0 %v1946, 64
    %v1949 = vpop.permute.xlu0 %1948
    %v1951 = vmul.f32 %v1932, %v1949
    %1953 = vrot.lane.b32.xlu0 %v1855, 32
    %v1954 = vpop.permute.xlu0 %1953
    %v1955 = vsel %vm219, %v1954, 0
    %1957 = vmatprep.subr.mxu0 0.0
    %1958 = vmatpush1.msra.mxu0 %v65
    %1959 = vmatprep.subr.mxu0 0.0
    %1960 = vmatpush1.msra.mxu0 %v66
    %1961 = vmatprep.subr.mxu0 0.0
    %1962 = vmatpush1.msra.mxu0 %v67
    %1963 = vmatprep.subr.mxu0 0.0
    %1964 = vmatpush1.msra.mxu0 %v68
    %1965 = vmatprep.subr.mxu0 0.0
    %1966 = vmatpush1.msra.mxu0 0.0
    %1967 = vmatprep.subr.mxu0 0.0
    %1968 = vmatpush1.msra.mxu0 0.0
    %1969 = vmatprep.subr.mxu0 0.0
    %1970 = vmatpush1.msra.mxu0 0.0
    %1971 = vmatprep.subr.mxu0 0.0
    %1972 = vmatpush1.msra.mxu0 0.0
    %1973 = vmatprep.subr.mxu0 0.0
    %1974 = vmatpush1.msra.mxu0 0.0
    %1975 = vmatprep.subr.mxu0 0.0
    %1976 = vmatpush1.msra.mxu0 0.0
    %1977 = vmatprep.subr.mxu0 0.0
    %1978 = vmatpush1.msra.mxu0 0.0
    %1979 = vmatprep.subr.mxu0 0.0
    %1980 = vmatpush1.msra.mxu0 0.0
    %1981 = vmatprep.subr.mxu0 0.0
    %1982 = vmatpush1.msra.mxu0 0.0
    %1983 = vmatprep.subr.mxu0 0.0
    %1984 = vmatpush1.msra.mxu0 0.0
    %1985 = vmatprep.subr.mxu0 0.0
    %1986 = vmatpush1.msra.mxu0 0.0
    %1987 = vmatprep.subr.mxu0 0.0
    %1988 = vmatpush1.msra.mxu0 0.0
    %1989 = vmatprep.subr.mxu0 0.0
    %1990 = vmatpush1.msra.mxu0 0.0
    %1991 = vmatprep.subr.mxu0 0.0
    %1992 = vmatpush1.msra.mxu0 0.0
    %1993 = vmatprep.subr.mxu0 0.0
    %1994 = vmatpush1.msra.mxu0 0.0
    %1995 = vmatprep.subr.mxu0 0.0
    %1996 = vmatpush1.msra.mxu0 0.0
    %1997 = vmatprep.subr.mxu0 0.0
    %1998 = vmatpush1.msra.mxu0 0.0
    %1999 = vmatprep.subr.mxu0 0.0
    %2000 = vmatpush1.msra.mxu0 0.0
    %2001 = vmatprep.subr.mxu0 0.0
    %2002 = vmatpush1.msra.mxu0 0.0
    %2003 = vmatprep.subr.mxu0 0.0
    %2004 = vmatpush1.msra.mxu0 0.0
    %2005 = vmatprep.subr.mxu0 0.0
    %2006 = vmatpush1.msra.mxu0 0.0
    %2007 = vmatprep.subr.mxu0 0.0
    %2008 = vmatpush1.msra.mxu0 0.0
    %2009 = vmatprep.subr.mxu0 0.0
    %2010 = vmatpush1.msra.mxu0 0.0
    %2011 = vmatprep.subr.mxu0 0.0
    %2012 = vmatpush1.msra.mxu0 0.0
    %2013 = vmatprep.subr.mxu0 0.0
    %2014 = vmatpush1.msra.mxu0 0.0
    %2015 = vmatprep.subr.mxu0 0.0
    %2016 = vmatpush1.msra.mxu0 0.0
    %2017 = vmatprep.subr.mxu0 0.0
    %2018 = vmatpush1.msra.mxu0 0.0
    %2019 = vmatprep.subr.mxu0 0.0
    %2020 = vmatpush1.msra.mxu0 0.0
    %2021 = vmatprep.mubr.f32.mxu0 0.0
    %2022 = vmatmul.mubr.f32.gmra.mrb[0].mxu0 %v1955
    %v2023 = vpop.f32.mrb[0].mxu0
    %v2024 = vadd.f32 0.0, %v2023
    %v2025 = vpop.f32.mrb[0].mxu0
    %2026 = vdwg.mxu0
    %2028 = vrot.lane.b32.xlu0 %v1951, 32
    %v2029 = vpop.permute.xlu0 %2028
    %v2030 = vsel %vm219, %v2029, 0
    %2032 = vmatprep.subr.mxu0 0.0
    %2033 = vmatpush1.msra.mxu0 %v57
    %2034 = vmatprep.subr.mxu0 0.0
    %2035 = vmatpush1.msra.mxu0 %v58
    %2036 = vmatprep.subr.mxu0 0.0
    %2037 = vmatpush1.msra.mxu0 %v59
    %2038 = vmatprep.subr.mxu0 0.0
    %2039 = vmatpush1.msra.mxu0 %v60
    %2040 = vmatprep.subr.mxu0 0.0
    %2041 = vmatpush1.msra.mxu0 0.0
    %2042 = vmatprep.subr.mxu0 0.0
    %2043 = vmatpush1.msra.mxu0 0.0
    %2044 = vmatprep.subr.mxu0 0.0
    %2045 = vmatpush1.msra.mxu0 0.0
    %2046 = vmatprep.subr.mxu0 0.0
    %2047 = vmatpush1.msra.mxu0 0.0
    %2048 = vmatprep.subr.mxu0 0.0
    %2049 = vmatpush1.msra.mxu0 0.0
    %2050 = vmatprep.subr.mxu0 0.0
    %2051 = vmatpush1.msra.mxu0 0.0
    %2052 = vmatprep.subr.mxu0 0.0
    %2053 = vmatpush1.msra.mxu0 0.0
    %2054 = vmatprep.subr.mxu0 0.0
    %2055 = vmatpush1.msra.mxu0 0.0
    %2056 = vmatprep.subr.mxu0 0.0
    %2057 = vmatpush1.msra.mxu0 0.0
    %2058 = vmatprep.subr.mxu0 0.0
    %2059 = vmatpush1.msra.mxu0 0.0
    %2060 = vmatprep.subr.mxu0 0.0
    %2061 = vmatpush1.msra.mxu0 0.0
    %2062 = vmatprep.subr.mxu0 0.0
    %2063 = vmatpush1.msra.mxu0 0.0
    %2064 = vmatprep.subr.mxu0 0.0
    %2065 = vmatpush1.msra.mxu0 0.0
    %2066 = vmatprep.subr.mxu0 0.0
    %2067 = vmatpush1.msra.mxu0 0.0
    %2068 = vmatprep.subr.mxu0 0.0
    %2069 = vmatpush1.msra.mxu0 0.0
    %2070 = vmatprep.subr.mxu0 0.0
    %2071 = vmatpush1.msra.mxu0 0.0
    %2072 = vmatprep.subr.mxu0 0.0
    %2073 = vmatpush1.msra.mxu0 0.0
    %2074 = vmatprep.subr.mxu0 0.0
    %2075 = vmatpush1.msra.mxu0 0.0
    %2076 = vmatprep.subr.mxu0 0.0
    %2077 = vmatpush1.msra.mxu0 0.0
    %2078 = vmatprep.subr.mxu0 0.0
    %2079 = vmatpush1.msra.mxu0 0.0
    %2080 = vmatprep.subr.mxu0 0.0
    %2081 = vmatpush1.msra.mxu0 0.0
    %2082 = vmatprep.subr.mxu0 0.0
    %2083 = vmatpush1.msra.mxu0 0.0
    %2084 = vmatprep.subr.mxu0 0.0
    %2085 = vmatpush1.msra.mxu0 0.0
    %2086 = vmatprep.subr.mxu0 0.0
    %2087 = vmatpush1.msra.mxu0 0.0
    %2088 = vmatprep.subr.mxu0 0.0
    %2089 = vmatpush1.msra.mxu0 0.0
    %2090 = vmatprep.subr.mxu0 0.0
    %2091 = vmatpush1.msra.mxu0 0.0
    %2092 = vmatprep.subr.mxu0 0.0
    %2093 = vmatpush1.msra.mxu0 0.0
    %2094 = vmatprep.subr.mxu0 0.0
    %2095 = vmatpush1.msra.mxu0 0.0
    %2096 = vmatprep.mubr.f32.mxu0 0.0
    %2097 = vmatmul.mubr.f32.gmra.mrb[0].mxu0 %v2030
    %v2098 = vpop.f32.mrb[0].mxu0
    %v2099 = vadd.f32 %v2024, %v2098
    %v2100 = vpop.f32.mrb[0].mxu0
    %2101 = vdwg.mxu0
    %v2102 = vadd.f32 %v2099, %v468
    %v2103 = vxor.u32 %v2102, 2147483648
    %v2104 = vmul.f32 %v2103, 1.442695
    %v2105 = vpow.pop %v2104
    %v2106 = vadd.f32 %v2105, 1.0
    %v2107 = vrcp.pop %v2106
    %v2108 = vmul.f32 1.0, %v2107
    %v2109 = vmul.f32 %v2108, 2.0
    %v2110 = vsub.f32 %v2109, 1.0
    %v2111 = vmul.f32 %v2108, %v1849
    %2113 = vrot.lane.b32.xlu0 %v2110, 64
    %v2114 = vpop.permute.xlu0 %2113
    %v2116 = vmul.f32 %v2108, %v2114
    %2118 = vrot.lane.b32.xlu0 %v2116, 32
    %v2119 = vpop.permute.xlu0 %2118
    %v2121 = vadd.f32 %v2111, %v2119
    %v2122 = vtanh.pop %v2121
    %2124 = vrot.lane.b32.xlu0 %v2122, 64
    %v2125 = vpop.permute.xlu0 %2124
    %v2127 = vmul.f32 %v2108, %v2125
    %2128 = vmatprep.subr.mxu0 0.0
    %2129 = vmatpush1.msra.mxu0 %v61
    %2130 = vmatprep.subr.mxu0 0.0
    %2131 = vmatpush1.msra.mxu0 %v62
    %2132 = vmatprep.subr.mxu0 0.0
    %2133 = vmatpush1.msra.mxu0 %v63
    %2134 = vmatprep.subr.mxu0 0.0
    %2135 = vmatpush1.msra.mxu0 %v64
    %2136 = vmatprep.subr.mxu0 0.0
    %2137 = vmatpush1.msra.mxu0 0.0
    %2138 = vmatprep.subr.mxu0 0.0
    %2139 = vmatpush1.msra.mxu0 0.0
    %2140 = vmatprep.subr.mxu0 0.0
    %2141 = vmatpush1.msra.mxu0 0.0
    %2142 = vmatprep.subr.mxu0 0.0
    %2143 = vmatpush1.msra.mxu0 0.0
    %2144 = vmatprep.subr.mxu0 0.0
    %2145 = vmatpush1.msra.mxu0 0.0
    %2146 = vmatprep.subr.mxu0 0.0
    %2147 = vmatpush1.msra.mxu0 0.0
    %2148 = vmatprep.subr.mxu0 0.0
    %2149 = vmatpush1.msra.mxu0 0.0
    %2150 = vmatprep.subr.mxu0 0.0
    %2151 = vmatpush1.msra.mxu0 0.0
    %2152 = vmatprep.subr.mxu0 0.0
    %2153 = vmatpush1.msra.mxu0 0.0
    %2154 = vmatprep.subr.mxu0 0.0
    %2155 = vmatpush1.msra.mxu0 0.0
    %2156 = vmatprep.subr.mxu0 0.0
    %2157 = vmatpush1.msra.mxu0 0.0
    %2158 = vmatprep.subr.mxu0 0.0
    %2159 = vmatpush1.msra.mxu0 0.0
    %2160 = vmatprep.subr.mxu0 0.0
    %2161 = vmatpush1.msra.mxu0 0.0
    %2162 = vmatprep.subr.mxu0 0.0
    %2163 = vmatpush1.msra.mxu0 0.0
    %2164 = vmatprep.subr.mxu0 0.0
    %2165 = vmatpush1.msra.mxu0 0.0
    %2166 = vmatprep.subr.mxu0 0.0
    %2167 = vmatpush1.msra.mxu0 0.0
    %2168 = vmatprep.subr.mxu0 0.0
    %2169 = vmatpush1.msra.mxu0 0.0
    %2170 = vmatprep.subr.mxu0 0.0
    %2171 = vmatpush1.msra.mxu0 0.0
    %2172 = vmatprep.subr.mxu0 0.0
    %2173 = vmatpush1.msra.mxu0 0.0
    %2174 = vmatprep.subr.mxu0 0.0
    %2175 = vmatpush1.msra.mxu0 0.0
    %2176 = vmatprep.subr.mxu0 0.0
    %2177 = vmatpush1.msra.mxu0 0.0
    %2178 = vmatprep.subr.mxu0 0.0
    %2179 = vmatpush1.msra.mxu0 0.0
    %2180 = vmatprep.subr.mxu0 0.0
    %2181 = vmatpush1.msra.mxu0 0.0
    %2182 = vmatprep.subr.mxu0 0.0
    %2183 = vmatpush1.msra.mxu0 0.0
    %2184 = vmatprep.subr.mxu0 0.0
    %2185 = vmatpush1.msra.mxu0 0.0
    %2186 = vmatprep.subr.mxu0 0.0
    %2187 = vmatpush1.msra.mxu0 0.0
    %2188 = vmatprep.subr.mxu0 0.0
    %2189 = vmatpush1.msra.mxu0 0.0
    %2190 = vmatprep.subr.mxu0 0.0
    %2191 = vmatpush1.msra.mxu0 0.0
    %2192 = vmatprep.mubr.f32.mxu0 0.0
    %2193 = vmatmul.mubr.f32.gmra.mrb[0].mxu0 %v2030
    %v2194 = vpop.f32.mrb[0].mxu0
    %v2195 = vadd.f32 0.0, %v2194
    %v2196 = vpop.f32.mrb[0].mxu0
    %2197 = vdwg.mxu0
    %v2198 = vadd.f32 %v216, %v2195
    %v2199 = vxor.u32 %v2198, 2147483648
    %v2200 = vmul.f32 %v2199, 1.442695
    %v2201 = vpow.pop %v2200
    %v2202 = vadd.f32 %v2201, 1.0
    %v2203 = vrcp.pop %v2202
    %v2204 = vmul.f32 1.0, %v2203
    %v2205 = vmul.f32 %v2204, 2.0
    %v2206 = vsub.f32 %v2205, 1.0
    %v2207 = vmul.f32 %v2204, %v1945
    %2209 = vrot.lane.b32.xlu0 %v2206, 64
    %v2210 = vpop.permute.xlu0 %2209
    %v2212 = vmul.f32 %v2204, %v2210
    %2214 = vrot.lane.b32.xlu0 %v2212, 32
    %v2215 = vpop.permute.xlu0 %2214
    %v2217 = vadd.f32 %v2207, %v2215
    %v2218 = vtanh.pop %v2217
    %2220 = vrot.lane.b32.xlu0 %v2218, 64
    %v2221 = vpop.permute.xlu0 %2220
    %v2223 = vmul.f32 %v2204, %v2221
    %2225 = vrot.lane.b32.xlu0 %v2127, 32
    %v2226 = vpop.permute.xlu0 %2225
    %v2227 = vsel %vm219, %v2226, 0
    %2229 = vmatprep.subr.mxu0 0.0
    %2230 = vmatpush1.msra.mxu0 %v65
    %2231 = vmatprep.subr.mxu0 0.0
    %2232 = vmatpush1.msra.mxu0 %v66
    %2233 = vmatprep.subr.mxu0 0.0
    %2234 = vmatpush1.msra.mxu0 %v67
    %2235 = vmatprep.subr.mxu0 0.0
    %2236 = vmatpush1.msra.mxu0 %v68
    %2237 = vmatprep.subr.mxu0 0.0
    %2238 = vmatpush1.msra.mxu0 0.0
    %2239 = vmatprep.subr.mxu0 0.0
    %2240 = vmatpush1.msra.mxu0 0.0
    %2241 = vmatprep.subr.mxu0 0.0
    %2242 = vmatpush1.msra.mxu0 0.0
    %2243 = vmatprep.subr.mxu0 0.0
    %2244 = vmatpush1.msra.mxu0 0.0
    %2245 = vmatprep.subr.mxu0 0.0
    %2246 = vmatpush1.msra.mxu0 0.0
    %2247 = vmatprep.subr.mxu0 0.0
    %2248 = vmatpush1.msra.mxu0 0.0
    %2249 = vmatprep.subr.mxu0 0.0
    %2250 = vmatpush1.msra.mxu0 0.0
    %2251 = vmatprep.subr.mxu0 0.0
    %2252 = vmatpush1.msra.mxu0 0.0
    %2253 = vmatprep.subr.mxu0 0.0
    %2254 = vmatpush1.msra.mxu0 0.0
    %2255 = vmatprep.subr.mxu0 0.0
    %2256 = vmatpush1.msra.mxu0 0.0
    %2257 = vmatprep.subr.mxu0 0.0
    %2258 = vmatpush1.msra.mxu0 0.0
    %2259 = vmatprep.subr.mxu0 0.0
    %2260 = vmatpush1.msra.mxu0 0.0
    %2261 = vmatprep.subr.mxu0 0.0
    %2262 = vmatpush1.msra.mxu0 0.0
    %2263 = vmatprep.subr.mxu0 0.0
    %2264 = vmatpush1.msra.mxu0 0.0
    %2265 = vmatprep.subr.mxu0 0.0
    %2266 = vmatpush1.msra.mxu0 0.0
    %2267 = vmatprep.subr.mxu0 0.0
    %2268 = vmatpush1.msra.mxu0 0.0
    %2269 = vmatprep.subr.mxu0 0.0
    %2270 = vmatpush1.msra.mxu0 0.0
    %2271 = vmatprep.subr.mxu0 0.0
    %2272 = vmatpush1.msra.mxu0 0.0
    %2273 = vmatprep.subr.mxu0 0.0
    %2274 = vmatpush1.msra.mxu0 0.0
    %2275 = vmatprep.subr.mxu0 0.0
    %2276 = vmatpush1.msra.mxu0 0.0
    %2277 = vmatprep.subr.mxu0 0.0
    %2278 = vmatpush1.msra.mxu0 0.0
    %2279 = vmatprep.subr.mxu0 0.0
    %2280 = vmatpush1.msra.mxu0 0.0
    %2281 = vmatprep.subr.mxu0 0.0
    %2282 = vmatpush1.msra.mxu0 0.0
    %2283 = vmatprep.subr.mxu0 0.0
    %2284 = vmatpush1.msra.mxu0 0.0
    %2285 = vmatprep.subr.mxu0 0.0
    %2286 = vmatpush1.msra.mxu0 0.0
    %2287 = vmatprep.subr.mxu0 0.0
    %2288 = vmatpush1.msra.mxu0 0.0
    %2289 = vmatprep.subr.mxu0 0.0
    %2290 = vmatpush1.msra.mxu0 0.0
    %2291 = vmatprep.subr.mxu0 0.0
    %2292 = vmatpush1.msra.mxu0 0.0
    %2293 = vmatprep.mubr.f32.mxu0 0.0
    %2294 = vmatmul.mubr.f32.gmra.mrb[0].mxu0 %v2227
    %v2295 = vpop.f32.mrb[0].mxu0
    %v2296 = vadd.f32 0.0, %v2295
    %v2297 = vpop.f32.mrb[0].mxu0
    %2298 = vdwg.mxu0
    %2300 = vrot.lane.b32.xlu0 %v2223, 32
    %v2301 = vpop.permute.xlu0 %2300
    %v2302 = vsel %vm219, %v2301, 0
    %2304 = vmatprep.subr.mxu0 0.0
    %2305 = vmatpush1.msra.mxu0 %v57
    %2306 = vmatprep.subr.mxu0 0.0
    %2307 = vmatpush1.msra.mxu0 %v58
    %2308 = vmatprep.subr.mxu0 0.0
    %2309 = vmatpush1.msra.mxu0 %v59
    %2310 = vmatprep.subr.mxu0 0.0
    %2311 = vmatpush1.msra.mxu0 %v60
    %2312 = vmatprep.subr.mxu0 0.0
    %2313 = vmatpush1.msra.mxu0 0.0
    %2314 = vmatprep.subr.mxu0 0.0
    %2315 = vmatpush1.msra.mxu0 0.0
    %2316 = vmatprep.subr.mxu0 0.0
    %2317 = vmatpush1.msra.mxu0 0.0
    %2318 = vmatprep.subr.mxu0 0.0
    %2319 = vmatpush1.msra.mxu0 0.0
    %2320 = vmatprep.subr.mxu0 0.0
    %2321 = vmatpush1.msra.mxu0 0.0
    %2322 = vmatprep.subr.mxu0 0.0
    %2323 = vmatpush1.msra.mxu0 0.0
    %2324 = vmatprep.subr.mxu0 0.0
    %2325 = vmatpush1.msra.mxu0 0.0
    %2326 = vmatprep.subr.mxu0 0.0
    %2327 = vmatpush1.msra.mxu0 0.0
    %2328 = vmatprep.subr.mxu0 0.0
    %2329 = vmatpush1.msra.mxu0 0.0
    %2330 = vmatprep.subr.mxu0 0.0
    %2331 = vmatpush1.msra.mxu0 0.0
    %2332 = vmatprep.subr.mxu0 0.0
    %2333 = vmatpush1.msra.mxu0 0.0
    %2334 = vmatprep.subr.mxu0 0.0
    %2335 = vmatpush1.msra.mxu0 0.0
    %2336 = vmatprep.subr.mxu0 0.0
    %2337 = vmatpush1.msra.mxu0 0.0
    %2338 = vmatprep.subr.mxu0 0.0
    %2339 = vmatpush1.msra.mxu0 0.0
    %2340 = vmatprep.subr.mxu0 0.0
    %2341 = vmatpush1.msra.mxu0 0.0
    %2342 = vmatprep.subr.mxu0 0.0
    %2343 = vmatpush1.msra.mxu0 0.0
    %2344 = vmatprep.subr.mxu0 0.0
    %2345 = vmatpush1.msra.mxu0 0.0
    %2346 = vmatprep.subr.mxu0 0.0
    %2347 = vmatpush1.msra.mxu0 0.0
    %2348 = vmatprep.subr.mxu0 0.0
    %2349 = vmatpush1.msra.mxu0 0.0
    %2350 = vmatprep.subr.mxu0 0.0
    %2351 = vmatpush1.msra.mxu0 0.0
    %2352 = vmatprep.subr.mxu0 0.0
    %2353 = vmatpush1.msra.mxu0 0.0
    %2354 = vmatprep.subr.mxu0 0.0
    %2355 = vmatpush1.msra.mxu0 0.0
    %2356 = vmatprep.subr.mxu0 0.0
    %2357 = vmatpush1.msra.mxu0 0.0
    %2358 = vmatprep.subr.mxu0 0.0
    %2359 = vmatpush1.msra.mxu0 0.0
    %2360 = vmatprep.subr.mxu0 0.0
    %2361 = vmatpush1.msra.mxu0 0.0
    %2362 = vmatprep.subr.mxu0 0.0
    %2363 = vmatpush1.msra.mxu0 0.0
    %2364 = vmatprep.subr.mxu0 0.0
    %2365 = vmatpush1.msra.mxu0 0.0
    %2366 = vmatprep.subr.mxu0 0.0
    %2367 = vmatpush1.msra.mxu0 0.0
    %2368 = vmatprep.mubr.f32.mxu0 0.0
    %2369 = vmatmul.mubr.f32.gmra.mrb[0].mxu0 %v2302
    %v2370 = vpop.f32.mrb[0].mxu0
    %v2371 = vadd.f32 %v2296, %v2370
    %v2372 = vpop.f32.mrb[0].mxu0
    %2373 = vdwg.mxu0
    %v2374 = vadd.f32 %v2371, %v468
    %v2375 = vxor.u32 %v2374, 2147483648
    %v2376 = vmul.f32 %v2375, 1.442695
    %v2377 = vpow.pop %v2376
    %v2378 = vadd.f32 %v2377, 1.0
    %v2379 = vrcp.pop %v2378
    %v2380 = vmul.f32 1.0, %v2379
    %v2381 = vmul.f32 %v2380, 2.0
    %v2382 = vsub.f32 %v2381, 1.0
    %v2383 = vmul.f32 %v2380, %v2121
    %2385 = vrot.lane.b32.xlu0 %v2382, 64
    %v2386 = vpop.permute.xlu0 %2385
    %v2388 = vmul.f32 %v2380, %v2386
    %2390 = vrot.lane.b32.xlu0 %v2388, 32
    %v2391 = vpop.permute.xlu0 %2390
    %v2393 = vadd.f32 %v2383, %v2391
    %v2394 = vtanh.pop %v2393
    %2396 = vrot.lane.b32.xlu0 %v2394, 64
    %v2397 = vpop.permute.xlu0 %2396
    %v2399 = vmul.f32 %v2380, %v2397
    %v2400 = vld [vmem:[%s7] sm:$0xff]
    %v2401 = vld [vmem:[%s7 + $0x8] sm:$0xff]
    %v2402 = vld [vmem:[%s7 + $0x10] sm:$0xff]
    %v2403 = vld [vmem:[%s7 + $0x18] sm:$0xff]
    %v2404 = vld [vmem:[#allocation4] sm:$0x1]
    %v2406 = vlaneseq
    %v2407 = vshrl.u32 %v2406, 7
    %v2408 = vsub.s32 0, %v2407
    %v2409 = vrot.slane %v2404, %v2408
    %2412 = vrot.lane.b32.xlu0 %v2399, 32
    %v2413 = vpop.permute.xlu0 %2412
    %v2414 = vsel %vm219, %v2413, 0
    %2416 = vmatprep.subr.mxu0 0.0
    %2417 = vmatpush1.msra.mxu0 %v2400
    %2418 = vmatprep.subr.mxu0 0.0
    %2419 = vmatpush1.msra.mxu0 %v2401
    %2420 = vmatprep.subr.mxu0 0.0
    %2421 = vmatpush1.msra.mxu0 %v2402
    %2422 = vmatprep.subr.mxu0 0.0
    %2423 = vmatpush1.msra.mxu0 %v2403
    %2424 = vmatprep.subr.mxu0 0.0
    %2425 = vmatpush1.msra.mxu0 0.0
    %2426 = vmatprep.subr.mxu0 0.0
    %2427 = vmatpush1.msra.mxu0 0.0
    %2428 = vmatprep.subr.mxu0 0.0
    %2429 = vmatpush1.msra.mxu0 0.0
    %2430 = vmatprep.subr.mxu0 0.0
    %2431 = vmatpush1.msra.mxu0 0.0
    %2432 = vmatprep.subr.mxu0 0.0
    %2433 = vmatpush1.msra.mxu0 0.0
    %2434 = vmatprep.subr.mxu0 0.0
    %2435 = vmatpush1.msra.mxu0 0.0
    %2436 = vmatprep.subr.mxu0 0.0
    %2437 = vmatpush1.msra.mxu0 0.0
    %2438 = vmatprep.subr.mxu0 0.0
    %2439 = vmatpush1.msra.mxu0 0.0
    %2440 = vmatprep.subr.mxu0 0.0
    %2441 = vmatpush1.msra.mxu0 0.0
    %2442 = vmatprep.subr.mxu0 0.0
    %2443 = vmatpush1.msra.mxu0 0.0
    %2444 = vmatprep.subr.mxu0 0.0
    %2445 = vmatpush1.msra.mxu0 0.0
    %2446 = vmatprep.subr.mxu0 0.0
    %2447 = vmatpush1.msra.mxu0 0.0
    %2448 = vmatprep.subr.mxu0 0.0
    %2449 = vmatpush1.msra.mxu0 0.0
    %2450 = vmatprep.subr.mxu0 0.0
    %2451 = vmatpush1.msra.mxu0 0.0
    %2452 = vmatprep.subr.mxu0 0.0
    %2453 = vmatpush1.msra.mxu0 0.0
    %2454 = vmatprep.subr.mxu0 0.0
    %2455 = vmatpush1.msra.mxu0 0.0
    %2456 = vmatprep.subr.mxu0 0.0
    %2457 = vmatpush1.msra.mxu0 0.0
    %2458 = vmatprep.subr.mxu0 0.0
    %2459 = vmatpush1.msra.mxu0 0.0
    %2460 = vmatprep.subr.mxu0 0.0
    %2461 = vmatpush1.msra.mxu0 0.0
    %2462 = vmatprep.subr.mxu0 0.0
    %2463 = vmatpush1.msra.mxu0 0.0
    %2464 = vmatprep.subr.mxu0 0.0
    %2465 = vmatpush1.msra.mxu0 0.0
    %2466 = vmatprep.subr.mxu0 0.0
    %2467 = vmatpush1.msra.mxu0 0.0
    %2468 = vmatprep.subr.mxu0 0.0
    %2469 = vmatpush1.msra.mxu0 0.0
    %2470 = vmatprep.subr.mxu0 0.0
    %2471 = vmatpush1.msra.mxu0 0.0
    %2472 = vmatprep.subr.mxu0 0.0
    %2473 = vmatpush1.msra.mxu0 0.0
    %2474 = vmatprep.subr.mxu0 0.0
    %2475 = vmatpush1.msra.mxu0 0.0
    %2476 = vmatprep.subr.mxu0 0.0
    %2477 = vmatpush1.msra.mxu0 0.0
    %2478 = vmatprep.subr.mxu0 0.0
    %2479 = vmatpush1.msra.mxu0 0.0
    %2480 = vmatprep.mubr.f32.mxu0 0.0
    %2481 = vmatmul.mubr.f32.gmra.mrb[0].mxu0 %v2414
    %v2482 = vpop.f32.mrb[0].mxu0
    %v2483 = vadd.f32 %v2409, %v2482
    %v2484 = vpop.f32.mrb[0].mxu0
    %2485 = vdwg.mxu0
    %2486 = vst [vmem:[%s9] sm:$0xff] %v2483
    // Predicated region
    $region46: #{lstm_model_forward.1} parent=1 // pred_check
      _
    $region47: #{lstm_model_forward.1} parent=1 // pred_check_branch
      %2488 = sbr.rel (0) target = $region49
    $region48: #{lstm_model_forward.1} parent=1 // pred_region
      _
    $region49: #{lstm_model_forward.1} parent=1 // pred_fallthru
      _
    // Predicated region
    $region50: #{lstm_model_forward.1} parent=1 // pred_check
      _
    $region51: #{lstm_model_forward.1} parent=1 // pred_check_branch
      %2490 = sbr.rel (0) target = $region53
    $region52: #{lstm_model_forward.1} parent=1 // pred_region
      _
    $region53: #{lstm_model_forward.1} parent=1 // pred_fallthru
      _
    %2491 = vsyncpa [#allocation3], 1
    %2492 = vsyncpa [#allocation5], 1

</llo_original>
